<compile_context>
chip_gen: v7x
topology: tpu7x:2x2x1
jax: 0.10.0
libtpu: 0.0.40
codegen_flags: <defaults>
</compile_context>

<pallas_src>
import numpy as np

import jax
import jax.numpy as jnp
from jax.experimental import pallas as pl
from jax.experimental.pallas import tpu as pltpu


# ----------------------------------------------------------------------------
# Fused forward kernel (conv1 -> pool -> conv2 -> pool -> fc1 -> fc2 -> fc3)
# ----------------------------------------------------------------------------
def _embedder_fused_kernel(xd_ref, w1_ref, b1_ref, w2_ref, b2_ref,
                           wf1_ref, bf1_ref, wf2_ref, bf2_ref,
                           wf3_ref, bf3_ref, o_ref, p2_scr):
    f32 = jnp.float32
    cd = w1_ref.dtype                 # bf16 compute dtype for the conv matmuls
    tb = o_ref.shape[0]               # images per grid step
    r14 = xd_ref.shape[0]             # tb * 14 row-pairs

    # xd row m = b*14 + j holds image-b rows 2j (lanes 0:28) and 2j+1 (28:56).
    xd = xd_ref[...]                  # (r14, 64) f32

    # ---- conv1 + full 2x2 max-pool, fused into ONE K=192 matmul ------------
    # Stack row-pairs m, m+1, m+2 along lanes (sublane roll, XLU slot).  The 4
    # (height-parity, width-parity) pool candidates land in 4 lane groups of
    # the 512-wide output, so pooling is a pure elementwise max (no row shifts).
    s1 = jnp.concatenate(
        [xd,
         pltpu.roll(xd, shift=r14 - 1, axis=0),
         pltpu.roll(xd, shift=r14 - 2, axis=0)],
        axis=1).astype(cd)                                           # (r14, 192)
    y1 = jnp.dot(s1, w1_ref[...], preferred_element_type=f32) + b1_ref[...]
    p1 = jnp.maximum(
        jnp.maximum(jnp.maximum(y1[:, 0:128], y1[:, 128:256]),
                    jnp.maximum(y1[:, 256:384], y1[:, 384:512])),
        0.0)                                                         # (r14, 128)

    # ---- conv2: 5 height taps fused along K (K=640); width-pool parity in N
    s2 = jnp.concatenate(
        [p1] + [pltpu.roll(p1, shift=r14 - k, axis=0) for k in range(1, 5)],
        axis=1).astype(cd)                                           # (r14, 640)
    y2 = jnp.dot(s2, w2_ref[...], preferred_element_type=f32) + b2_ref[...]
    # TODO(synk): nn.Dropout2d / F.dropout are identity in eval mode; a
    # training-mode pltpu.prng_seed/prng_random_bits mask is not implemented.
    z2 = jnp.maximum(y2[:, 0:128], y2[:, 128:256])                   # width pool
    p2_scr[...] = z2                                                 # (r14, 128)

    # ---- height pool + relu only on the 4 rows/image fc1 consumes ----------
    # (strided VMEM reads replace the old O(TB^2) sel matmul gather)
    gs = []
    for ph2 in range(4):
        a = p2_scr[pl.ds(2 * ph2, tb, stride=14), :]
        b = p2_scr[pl.ds(2 * ph2 + 1, tb, stride=14), :]
        gs.append(jnp.maximum(jnp.maximum(a, b), 0.0))               # (tb, 128)
    g = jnp.concatenate(gs, axis=1)                                  # (tb, 512)

    # ---- fc1 -> relu -> fc2 -> fc3 (f32, tiny) ------------------------------
    h1 = jnp.maximum(
        jnp.dot(g, wf1_ref[...], preferred_element_type=f32) + bf1_ref[...], 0.0)
    h2 = jnp.dot(h1, wf2_ref[...], preferred_element_type=f32) + bf2_ref[...]
    h3 = jnp.dot(h2, wf3_ref[...], preferred_element_type=f32) + bf3_ref[...]
    o_ref[...] = h3.astype(o_ref.dtype)                              # (tb, 128)


# ----------------------------------------------------------------------------
# One-time parameter preprocessing (fused conv weights, padded/transposed fcs)
# ----------------------------------------------------------------------------
def prepare_fused_params(p, compute_dtype=jnp.bfloat16):
    f32 = np.float32
    w1 = np.asarray(p["conv1_w"], f32)      # (10, 1, 5, 5)
    b1 = np.asarray(p["conv1_b"], f32)      # (10,)
    w2 = np.asarray(p["conv2_w"], f32)      # (20, 10, 5, 5)
    b2 = np.asarray(p["conv2_b"], f32)      # (20,)

    # conv1 (+ 2x2 pool) fused weight, K=192, N=512.
    # LHS row m = b*14+j holds image rows 2(j+t) / 2(j+t)+1 at lanes
    # 64t+[0:28] / 64t+[28:56] for t = 0..2.  Output col 128*(2*he+we)+c*12+pw.
    W1 = np.zeros((192, 512), f32)
    for c in range(10):
        for kh in range(5):
            for kw in range(5):
                wv = w1[c, 0, kh, kw]
                for he in range(2):
                    t, r = divmod(he + kh, 2)
                    for we in range(2):
                        base = 128 * (2 * he + we) + c * 12
                        for pw in range(12):
                            iw = 2 * pw + we + kw
                            W1[64 * t + 28 * r + iw, base + pw] += wv
    B1 = np.zeros((1, 512), f32)
    for grp in range(4):
        for c in range(10):
            B1[0, 128 * grp + c * 12:128 * grp + c * 12 + 12] = b1[c]

    # conv2 (+ width-pool parity) fused weight, K=640, N=256.
    # LHS lane 128*kh + c*12 + pw = pool1 row (j+kh), channel c, width pw.
    W2 = np.zeros((640, 256), f32)
    for d in range(20):
        for c in range(10):
            for kh in range(5):
                for kw in range(5):
                    wv = w2[d, c, kh, kw]
                    for we2 in range(2):
                        for pw2 in range(4):
                            pw = 2 * pw2 + we2 + kw
                            W2[128 * kh + c * 12 + pw,
                               128 * we2 + d * 4 + pw2] += wv
    B2 = np.zeros((1, 256), f32)
    for we2 in range(2):
        for d in range(20):
            B2[0, 128 * we2 + d * 4:128 * we2 + d * 4 + 4] = b2[d]

    # fc1 over the 4 gathered pooled-height rows, matching .view(-1, 320) order.
    fc1_w4 = np.asarray(p["fc1_w"], f32).reshape(50, 20, 4, 4)  # (j, d, ph2, pw2)
    Wf1 = np.zeros((512, 50), f32)
    for ph2 in range(4):
        for d in range(20):
            for pw2 in range(4):
                Wf1[128 * ph2 + d * 4 + pw2, :] = fc1_w4[:, d, ph2, pw2]

    # fc3 padded to 128 output columns so the final store is lane-dense.
    Wf3 = np.zeros((50, 128), f32)
    Wf3[:, :8] = np.asarray(p["fc3_w"], f32).T
    Bf3 = np.zeros((1, 128), f32)
    Bf3[0, :8] = np.asarray(p["fc3_b"], f32)

    cd = compute_dtype
    return {
        "W1": jnp.asarray(W1).astype(cd), "B1": jnp.asarray(B1),
        "W2": jnp.asarray(W2).astype(cd), "B2": jnp.asarray(B2),
        "Wf1": jnp.asarray(Wf1),
        "Bf1": jnp.asarray(np.asarray(p["fc1_b"], f32).reshape(1, 50)),
        "Wf2": jnp.asarray(np.ascontiguousarray(np.asarray(p["fc2_w"], f32).T)),
        "Bf2": jnp.asarray(np.asarray(p["fc2_b"], f32).reshape(1, 50)),
        "Wf3": jnp.asarray(Wf3), "Bf3": jnp.asarray(Bf3),
    }


# ----------------------------------------------------------------------------
# Forward wrapper
# ----------------------------------------------------------------------------
def embedder_forward(x, fp, tile_b=64):
    B = x.shape[0]
    assert x.shape[1:] == (1, 28, 28), x.shape

    # Batch tile: 64 by default (review: 64-128, multiple of 16); shrink for
    # tiny batches.  On v6e/v5e (128 MiB VMEM) tile_b can be pushed to 128+.
    tile_b = max(16, (int(tile_b) // 16) * 16)
    tb = min(tile_b, ((B + 15) // 16) * 16)
    B_pad = ((B + tb - 1) // tb) * tb
    n_tiles = B_pad // tb
    r14 = tb * 14

    xr = x.reshape(B, 28, 28).astype(jnp.float32)
    if B_pad != B:
        xr = jnp.pad(xr, ((0, B_pad - B), (0, 0), (0, 0)))
    # Pair consecutive image rows along lanes (a free row-major reshape) and
    # pad each row-pair to 64 lanes.
    xd = jnp.pad(xr.reshape(B_pad * 14, 56), ((0, 0), (0, 8)))   # (B_pad*14, 64)

    weight_args = (fp["W1"], fp["B1"], fp["W2"], fp["B2"], fp["Wf1"], fp["Bf1"],
                   fp["Wf2"], fp["Bf2"], fp["Wf3"], fp["Bf3"])

    def _full_spec(a):
        nd = a.ndim
        return pl.BlockSpec(a.shape, lambda i, _nd=nd: (0,) * _nd)

    grid_spec = pltpu.PrefetchScalarGridSpec(
        num_scalar_prefetch=0,
        grid=(n_tiles,),
        in_specs=[pl.BlockSpec((r14, 64), lambda i: (i, 0))]
                 + [_full_spec(a) for a in weight_args],
        out_specs=pl.BlockSpec((tb, 128), lambda i: (i, 0)),
        scratch_shapes=[pltpu.VMEM((r14, 128), jnp.float32)],
    )

    flops_tile = 2 * (r14 * 192 * 512 + r14 * 640 * 256
                      + tb * 512 * 50 + tb * 50 * 50 + tb * 50 * 128)
    bytes_acc = (int(xd.size) * 4
                 + sum(int(a.size) * a.dtype.itemsize for a in weight_args)
                 + B_pad * 128 * 4)

    out = pl.pallas_call(
        _embedder_fused_kernel,
        out_shape=jax.ShapeDtypeStruct((B_pad, 128), jnp.float32),
        grid_spec=grid_spec,
        compiler_params=pltpu.CompilerParams(
            dimension_semantics=("parallel",),
            vmem_limit_bytes=40 * 1024 * 1024),
        cost_estimate=pl.CostEstimate(flops=int(flops_tile) * n_tiles,
                                      transcendentals=0,
                                      bytes_accessed=int(bytes_acc)),
    )(xd, *weight_args)
    return out[:B, :8]


# ----------------------------------------------------------------------------
# Plain-JAX reference (sanity check) and PyTorch-style init
# ----------------------------------------------------------------------------
def reference_forward(x, p):
    def conv(h, w, b):
        y = jax.lax.conv_general_dilated(
            h, w, window_strides=(1, 1), padding="VALID",
            dimension_numbers=("NCHW", "OIHW", "NCHW"))
        return y + b.reshape(1, -1, 1, 1)

    def pool_relu(y):
        m = jax.lax.reduce_window(y, -jnp.inf, jax.lax.max,
                                  (1, 1, 2, 2), (1, 1, 2, 2), "VALID")
        return jnp.maximum(m, 0.0)

    h = pool_relu(conv(x, p["conv1_w"], p["conv1_b"]))
    h = pool_relu(conv(h, p["conv2_w"], p["conv2_b"]))
    h = h.reshape(-1, 320)
    h = jnp.maximum(h @ p["fc1_w"].T + p["fc1_b"], 0.0)
    h = h @ p["fc2_w"].T + p["fc2_b"]
    return h @ p["fc3_w"].T + p["fc3_b"]


def init_params(key):
    ks = jax.random.split(key, 10)

    def u(k, shape, fan_in):
        bound = 1.0 / jnp.sqrt(fan_in)
        return jax.random.uniform(k, shape, jnp.float32, -bound, bound)

    return {
        "conv1_w": u(ks[0], (10, 1, 5, 5), 1 * 5 * 5),
        "conv1_b": u(ks[1], (10,), 1 * 5 * 5),
        "conv2_w": u(ks[2], (20, 10, 5, 5), 10 * 5 * 5),
        "conv2_b": u(ks[3], (20,), 10 * 5 * 5),
        "fc1_w":   u(ks[4], (50, 320), 320),
        "fc1_b":   u(ks[5], (50,), 320),
        "fc2_w":   u(ks[6], (50, 50), 50),
        "fc2_b":   u(ks[7], (50,), 50),
        "fc3_w":   u(ks[8], (8, 50), 50),
        "fc3_b":   u(ks[9], (8,), 50),
    }


if __name__ == "__main__":
    key = jax.random.PRNGKey(0)
    k_x, k_p = jax.random.split(key)
    x = jax.random.normal(k_x, (2, 1, 28, 28), jnp.float32)
    params = init_params(k_p)

    fused = prepare_fused_params(params)
    out = jax.block_until_ready(embedder_forward(x, fused))
    assert out.shape == (2, 8), out.shape

    ref = jax.block_until_ready(reference_forward(x, params))
    err = float(jnp.max(jnp.abs(out - ref)))
    assert err < 5e-2, f"max abs err vs reference: {err}"

    print("KERNEL_OK")
</pallas_src>

<mosaic_0001>
module attributes {stable_mosaic.version = 11 : i64} {
  func.func @_embedder_fused_kernel(%arg0: i32, %arg1: memref<224x64xf32, #tpu.memory_space<vmem>>, %arg2: memref<192x512xbf16, #tpu.memory_space<vmem>>, %arg3: memref<1x512xf32, #tpu.memory_space<vmem>>, %arg4: memref<640x256xbf16, #tpu.memory_space<vmem>>, %arg5: memref<1x256xf32, #tpu.memory_space<vmem>>, %arg6: memref<512x50xf32, #tpu.memory_space<vmem>>, %arg7: memref<1x50xf32, #tpu.memory_space<vmem>>, %arg8: memref<50x50xf32, #tpu.memory_space<vmem>>, %arg9: memref<1x50xf32, #tpu.memory_space<vmem>>, %arg10: memref<50x128xf32, #tpu.memory_space<vmem>>, %arg11: memref<1x128xf32, #tpu.memory_space<vmem>>, %arg12: memref<16x128xf32, #tpu.memory_space<vmem>>, %arg13: memref<224x128xf32, #tpu.memory_space<vmem>>) attributes {dimension_semantics = [#tpu.dimension_semantics<parallel>], iteration_bounds = array<i64: 1>, scalar_prefetch = 0 : i64, scratch_operands = 1 : i64, tpu.core_type = #tpu.core_type<tc>, window_params = [{transform_indices = @transform_0, window_bounds = array<i64: 224, 64>}, {pipeline_mode = #tpu.pipeline_mode<synchronous>, transform_indices = @transform_1, window_bounds = array<i64: 192, 512>}, {pipeline_mode = #tpu.pipeline_mode<synchronous>, transform_indices = @transform_2, window_bounds = array<i64: 1, 512>}, {pipeline_mode = #tpu.pipeline_mode<synchronous>, transform_indices = @transform_3, window_bounds = array<i64: 640, 256>}, {pipeline_mode = #tpu.pipeline_mode<synchronous>, transform_indices = @transform_4, window_bounds = array<i64: 1, 256>}, {pipeline_mode = #tpu.pipeline_mode<synchronous>, transform_indices = @transform_5, window_bounds = array<i64: 512, 50>}, {pipeline_mode = #tpu.pipeline_mode<synchronous>, transform_indices = @transform_6, window_bounds = array<i64: 1, 50>}, {pipeline_mode = #tpu.pipeline_mode<synchronous>, transform_indices = @transform_7, window_bounds = array<i64: 50, 50>}, {pipeline_mode = #tpu.pipeline_mode<synchronous>, transform_indices = @transform_8, window_bounds = array<i64: 1, 50>}, {pipeline_mode = #tpu.pipeline_mode<synchronous>, transform_indices = @transform_9, window_bounds = array<i64: 50, 128>}, {pipeline_mode = #tpu.pipeline_mode<synchronous>, transform_indices = @transform_10, window_bounds = array<i64: 1, 128>}, {transform_indices = @transform_11, window_bounds = array<i64: 16, 128>}]} {
    %c0 = arith.constant 0 : index
    %c0_0 = arith.constant 0 : index
    %0 = vector.load %arg1[%c0, %c0_0] : memref<224x64xf32, #tpu.memory_space<vmem>>, vector<224x64xf32>
    %c223_i32 = arith.constant 223 : i32
    %1 = tpu.dynamic_rotate %0 by %c223_i32 dim 0 : vector<224x64xf32>, i32 -> vector<224x64xf32>
    %c222_i32 = arith.constant 222 : i32
    %2 = tpu.dynamic_rotate %0 by %c222_i32 dim 0 : vector<224x64xf32>, i32 -> vector<224x64xf32>
    %3 = tpu.concatenate %0, %1, %2 in 1 : vector<224x64xf32>, vector<224x64xf32>, vector<224x64xf32> -> vector<224x192xf32>
    %4 = arith.truncf %3 : vector<224x192xf32> to vector<224x192xbf16>
    %c0_1 = arith.constant 0 : index
    %c0_2 = arith.constant 0 : index
    %5 = vector.load %arg2[%c0_1, %c0_2] : memref<192x512xbf16, #tpu.memory_space<vmem>>, vector<192x512xbf16>
    %cst = arith.constant dense<0.000000e+00> : vector<224x512xf32>
    %6 = tpu.matmul %4, %5, %cst {dimension_numbers = #tpu.dot_dimension_numbers<[1], [0], [0], [1], [0, 0, 1, 1], [], []>} : vector<224x192xbf16>, vector<192x512xbf16>, vector<224x512xf32> -> vector<224x512xf32>
    %c0_3 = arith.constant 0 : index
    %c0_4 = arith.constant 0 : index
    %7 = vector.load %arg3[%c0_3, %c0_4] : memref<1x512xf32, #tpu.memory_space<vmem>>, vector<1x512xf32>
    %8 = vector.broadcast %7 : vector<1x512xf32> to vector<224x512xf32>
    %9 = arith.addf %6, %8 : vector<224x512xf32>
    %10 = vector.extract_strided_slice %9 {offsets = [0, 0], sizes = [224, 128], strides = [1, 1]} : vector<224x512xf32> to vector<224x128xf32>
    %11 = vector.extract_strided_slice %9 {offsets = [0, 128], sizes = [224, 128], strides = [1, 1]} : vector<224x512xf32> to vector<224x128xf32>
    %12 = arith.maximumf %10, %11 : vector<224x128xf32>
    %13 = vector.extract_strided_slice %9 {offsets = [0, 256], sizes = [224, 128], strides = [1, 1]} : vector<224x512xf32> to vector<224x128xf32>
    %14 = vector.extract_strided_slice %9 {offsets = [0, 384], sizes = [224, 128], strides = [1, 1]} : vector<224x512xf32> to vector<224x128xf32>
    %15 = arith.maximumf %13, %14 : vector<224x128xf32>
    %16 = arith.maximumf %12, %15 : vector<224x128xf32>
    %cst_5 = arith.constant 0.000000e+00 : f32
    %17 = vector.broadcast %cst_5 : f32 to vector<224x128xf32>
    %18 = arith.maximumf %16, %17 : vector<224x128xf32>
    %c223_i32_6 = arith.constant 223 : i32
    %19 = tpu.dynamic_rotate %18 by %c223_i32_6 dim 0 : vector<224x128xf32>, i32 -> vector<224x128xf32>
    %c222_i32_7 = arith.constant 222 : i32
    %20 = tpu.dynamic_rotate %18 by %c222_i32_7 dim 0 : vector<224x128xf32>, i32 -> vector<224x128xf32>
    %c221_i32 = arith.constant 221 : i32
    %21 = tpu.dynamic_rotate %18 by %c221_i32 dim 0 : vector<224x128xf32>, i32 -> vector<224x128xf32>
    %c220_i32 = arith.constant 220 : i32
    %22 = tpu.dynamic_rotate %18 by %c220_i32 dim 0 : vector<224x128xf32>, i32 -> vector<224x128xf32>
    %23 = tpu.concatenate %18, %19, %20, %21, %22 in 1 : vector<224x128xf32>, vector<224x128xf32>, vector<224x128xf32>, vector<224x128xf32>, vector<224x128xf32> -> vector<224x640xf32>
    %24 = arith.truncf %23 : vector<224x640xf32> to vector<224x640xbf16>
    %c0_8 = arith.constant 0 : index
    %c0_9 = arith.constant 0 : index
    %25 = vector.load %arg4[%c0_8, %c0_9] : memref<640x256xbf16, #tpu.memory_space<vmem>>, vector<640x256xbf16>
    %cst_10 = arith.constant dense<0.000000e+00> : vector<224x256xf32>
    %26 = tpu.matmul %24, %25, %cst_10 {dimension_numbers = #tpu.dot_dimension_numbers<[1], [0], [0], [1], [0, 0, 1, 1], [], []>} : vector<224x640xbf16>, vector<640x256xbf16>, vector<224x256xf32> -> vector<224x256xf32>
    %c0_11 = arith.constant 0 : index
    %c0_12 = arith.constant 0 : index
    %27 = vector.load %arg5[%c0_11, %c0_12] : memref<1x256xf32, #tpu.memory_space<vmem>>, vector<1x256xf32>
    %28 = vector.broadcast %27 : vector<1x256xf32> to vector<224x256xf32>
    %29 = arith.addf %26, %28 : vector<224x256xf32>
    %30 = vector.extract_strided_slice %29 {offsets = [0, 0], sizes = [224, 128], strides = [1, 1]} : vector<224x256xf32> to vector<224x128xf32>
    %31 = vector.extract_strided_slice %29 {offsets = [0, 128], sizes = [224, 128], strides = [1, 1]} : vector<224x256xf32> to vector<224x128xf32>
    %32 = arith.maximumf %30, %31 : vector<224x128xf32>
    %c0_13 = arith.constant 0 : index
    %c0_14 = arith.constant 0 : index
    %33 = vector.load %arg13[%c0_13, %c0_14] : memref<224x128xf32, #tpu.memory_space<vmem>>, vector<224x128xf32>
    tpu.vector_store %arg13[%c0_13, %c0_14], %32 {strides = array<i32>} : memref<224x128xf32, #tpu.memory_space<vmem>>, vector<224x128xf32>,
    %c0_15 = arith.constant 0 : index
    %c0_16 = arith.constant 0 : index
    %34 = tpu.strided_load %arg13[%c0_15, %c0_16] {strides = array<i32: 14, 1>} : memref<224x128xf32, #tpu.memory_space<vmem>>, vector<16x128xf32>
    %c1 = arith.constant 1 : index
    %c0_17 = arith.constant 0 : index
    %35 = tpu.strided_load %arg13[%c1, %c0_17] {strides = array<i32: 14, 1>} : memref<224x128xf32, #tpu.memory_space<vmem>>, vector<16x128xf32>
    %36 = arith.maximumf %34, %35 : vector<16x128xf32>
    %cst_18 = arith.constant 0.000000e+00 : f32
    %37 = vector.broadcast %cst_18 : f32 to vector<16x128xf32>
    %38 = arith.maximumf %36, %37 : vector<16x128xf32>
    %c2 = arith.constant 2 : index
    %c0_19 = arith.constant 0 : index
    %39 = tpu.strided_load %arg13[%c2, %c0_19] {strides = array<i32: 14, 1>} : memref<224x128xf32, #tpu.memory_space<vmem>>, vector<16x128xf32>
    %c3 = arith.constant 3 : index
    %c0_20 = arith.constant 0 : index
    %40 = tpu.strided_load %arg13[%c3, %c0_20] {strides = array<i32: 14, 1>} : memref<224x128xf32, #tpu.memory_space<vmem>>, vector<16x128xf32>
    %41 = arith.maximumf %39, %40 : vector<16x128xf32>
    %cst_21 = arith.constant 0.000000e+00 : f32
    %42 = vector.broadcast %cst_21 : f32 to vector<16x128xf32>
    %43 = arith.maximumf %41, %42 : vector<16x128xf32>
    %c4 = arith.constant 4 : index
    %c0_22 = arith.constant 0 : index
    %44 = tpu.strided_load %arg13[%c4, %c0_22] {strides = array<i32: 14, 1>} : memref<224x128xf32, #tpu.memory_space<vmem>>, vector<16x128xf32>
    %c5 = arith.constant 5 : index
    %c0_23 = arith.constant 0 : index
    %45 = tpu.strided_load %arg13[%c5, %c0_23] {strides = array<i32: 14, 1>} : memref<224x128xf32, #tpu.memory_space<vmem>>, vector<16x128xf32>
    %46 = arith.maximumf %44, %45 : vector<16x128xf32>
    %cst_24 = arith.constant 0.000000e+00 : f32
    %47 = vector.broadcast %cst_24 : f32 to vector<16x128xf32>
    %48 = arith.maximumf %46, %47 : vector<16x128xf32>
    %c6 = arith.constant 6 : index
    %c0_25 = arith.constant 0 : index
    %49 = tpu.strided_load %arg13[%c6, %c0_25] {strides = array<i32: 14, 1>} : memref<224x128xf32, #tpu.memory_space<vmem>>, vector<16x128xf32>
    %c7 = arith.constant 7 : index
    %c0_26 = arith.constant 0 : index
    %50 = tpu.strided_load %arg13[%c7, %c0_26] {strides = array<i32: 14, 1>} : memref<224x128xf32, #tpu.memory_space<vmem>>, vector<16x128xf32>
    %51 = arith.maximumf %49, %50 : vector<16x128xf32>
    %cst_27 = arith.constant 0.000000e+00 : f32
    %52 = vector.broadcast %cst_27 : f32 to vector<16x128xf32>
    %53 = arith.maximumf %51, %52 : vector<16x128xf32>
    %54 = tpu.concatenate %38, %43, %48, %53 in 1 : vector<16x128xf32>, vector<16x128xf32>, vector<16x128xf32>, vector<16x128xf32> -> vector<16x512xf32>
    %c0_28 = arith.constant 0 : index
    %c0_29 = arith.constant 0 : index
    %55 = vector.load %arg6[%c0_28, %c0_29] : memref<512x50xf32, #tpu.memory_space<vmem>>, vector<512x50xf32>
    %cst_30 = arith.constant dense<0.000000e+00> : vector<16x50xf32>
    %56 = tpu.matmul %54, %55, %cst_30 {dimension_numbers = #tpu.dot_dimension_numbers<[1], [0], [0], [1], [0, 0, 1, 1], [], []>} : vector<16x512xf32>, vector<512x50xf32>, vector<16x50xf32> -> vector<16x50xf32>
    %c0_31 = arith.constant 0 : index
    %c0_32 = arith.constant 0 : index
    %57 = vector.load %arg7[%c0_31, %c0_32] : memref<1x50xf32, #tpu.memory_space<vmem>>, vector<1x50xf32>
    %58 = vector.broadcast %57 : vector<1x50xf32> to vector<16x50xf32>
    %59 = arith.addf %56, %58 : vector<16x50xf32>
    %cst_33 = arith.constant 0.000000e+00 : f32
    %60 = vector.broadcast %cst_33 : f32 to vector<16x50xf32>
    %61 = arith.maximumf %59, %60 : vector<16x50xf32>
    %c0_34 = arith.constant 0 : index
    %c0_35 = arith.constant 0 : index
    %62 = vector.load %arg8[%c0_34, %c0_35] : memref<50x50xf32, #tpu.memory_space<vmem>>, vector<50x50xf32>
    %cst_36 = arith.constant dense<0.000000e+00> : vector<16x50xf32>
    %63 = tpu.matmul %61, %62, %cst_36 {dimension_numbers = #tpu.dot_dimension_numbers<[1], [0], [0], [1], [0, 0, 1, 1], [], []>} : vector<16x50xf32>, vector<50x50xf32>, vector<16x50xf32> -> vector<16x50xf32>
    %c0_37 = arith.constant 0 : index
    %c0_38 = arith.constant 0 : index
    %64 = vector.load %arg9[%c0_37, %c0_38] : memref<1x50xf32, #tpu.memory_space<vmem>>, vector<1x50xf32>
    %65 = vector.broadcast %64 : vector<1x50xf32> to vector<16x50xf32>
    %66 = arith.addf %63, %65 : vector<16x50xf32>
    %c0_39 = arith.constant 0 : index
    %c0_40 = arith.constant 0 : index
    %67 = vector.load %arg10[%c0_39, %c0_40] : memref<50x128xf32, #tpu.memory_space<vmem>>, vector<50x128xf32>
    %cst_41 = arith.constant dense<0.000000e+00> : vector<16x128xf32>
    %68 = tpu.matmul %66, %67, %cst_41 {dimension_numbers = #tpu.dot_dimension_numbers<[1], [0], [0], [1], [0, 0, 1, 1], [], []>} : vector<16x50xf32>, vector<50x128xf32>, vector<16x128xf32> -> vector<16x128xf32>
    %c0_42 = arith.constant 0 : index
    %c0_43 = arith.constant 0 : index
    %69 = vector.load %arg11[%c0_42, %c0_43] : memref<1x128xf32, #tpu.memory_space<vmem>>, vector<1x128xf32>
    %70 = vector.broadcast %69 : vector<1x128xf32> to vector<16x128xf32>
    %71 = arith.addf %68, %70 : vector<16x128xf32>
    %c0_44 = arith.constant 0 : index
    %c0_45 = arith.constant 0 : index
    %72 = vector.load %arg12[%c0_44, %c0_45] : memref<16x128xf32, #tpu.memory_space<vmem>>, vector<16x128xf32>
    tpu.vector_store %arg12[%c0_44, %c0_45], %71 {strides = array<i32>} : memref<16x128xf32, #tpu.memory_space<vmem>>, vector<16x128xf32>,
    return
  }
  func.func @transform_0(%arg0: i32) -> (i32, i32) {
    %c0_i32 = arith.constant 0 : i32
    %c0_i32_0 = arith.constant 0 : i32
    return %arg0, %c0_i32 : i32, i32
  }
  func.func @transform_1(%arg0: i32) -> (i32, i32) {
    %c0_i32 = arith.constant 0 : i32
    %c0_i32_0 = arith.constant 0 : i32
    %c0_i32_1 = arith.constant 0 : i32
    return %c0_i32, %c0_i32_0 : i32, i32
  }
  func.func @transform_2(%arg0: i32) -> (i32, i32) {
    %c0_i32 = arith.constant 0 : i32
    %c0_i32_0 = arith.constant 0 : i32
    %c0_i32_1 = arith.constant 0 : i32
    return %c0_i32, %c0_i32_0 : i32, i32
  }
  func.func @transform_3(%arg0: i32) -> (i32, i32) {
    %c0_i32 = arith.constant 0 : i32
    %c0_i32_0 = arith.constant 0 : i32
    %c0_i32_1 = arith.constant 0 : i32
    return %c0_i32, %c0_i32_0 : i32, i32
  }
  func.func @transform_4(%arg0: i32) -> (i32, i32) {
    %c0_i32 = arith.constant 0 : i32
    %c0_i32_0 = arith.constant 0 : i32
    %c0_i32_1 = arith.constant 0 : i32
    return %c0_i32, %c0_i32_0 : i32, i32
  }
  func.func @transform_5(%arg0: i32) -> (i32, i32) {
    %c0_i32 = arith.constant 0 : i32
    %c0_i32_0 = arith.constant 0 : i32
    %c0_i32_1 = arith.constant 0 : i32
    return %c0_i32, %c0_i32_0 : i32, i32
  }
  func.func @transform_6(%arg0: i32) -> (i32, i32) {
    %c0_i32 = arith.constant 0 : i32
    %c0_i32_0 = arith.constant 0 : i32
    %c0_i32_1 = arith.constant 0 : i32
    return %c0_i32, %c0_i32_0 : i32, i32
  }
  func.func @transform_7(%arg0: i32) -> (i32, i32) {
    %c0_i32 = arith.constant 0 : i32
    %c0_i32_0 = arith.constant 0 : i32
    %c0_i32_1 = arith.constant 0 : i32
    return %c0_i32, %c0_i32_0 : i32, i32
  }
  func.func @transform_8(%arg0: i32) -> (i32, i32) {
    %c0_i32 = arith.constant 0 : i32
    %c0_i32_0 = arith.constant 0 : i32
    %c0_i32_1 = arith.constant 0 : i32
    return %c0_i32, %c0_i32_0 : i32, i32
  }
  func.func @transform_9(%arg0: i32) -> (i32, i32) {
    %c0_i32 = arith.constant 0 : i32
    %c0_i32_0 = arith.constant 0 : i32
    %c0_i32_1 = arith.constant 0 : i32
    return %c0_i32, %c0_i32_0 : i32, i32
  }
  func.func @transform_10(%arg0: i32) -> (i32, i32) {
    %c0_i32 = arith.constant 0 : i32
    %c0_i32_0 = arith.constant 0 : i32
    %c0_i32_1 = arith.constant 0 : i32
    return %c0_i32, %c0_i32_0 : i32, i32
  }
  func.func @transform_11(%arg0: i32) -> (i32, i32) {
    %c0_i32 = arith.constant 0 : i32
    %c0_i32_0 = arith.constant 0 : i32
    return %arg0, %c0_i32 : i32, i32
  }
}

</mosaic_0001>

<llo_original>
// kernel: tpu_custom_call.1
$region0: #{tpu_custom_call.1}
  #allocation0 [shape = 'u32[]', space=smem, size = 0x4, offset = 0x4, fixed_abs, tag = 'smem constant byte address 0x4 - core index']
  #allocation1 [shape = 'u32[144,128]{1,0:T(1,128)}', space=vmem, size = 0x12000, scoped, tag = 'internal scratch']
  #allocation2 [shape = 'f32[224,128]{1,0:T(8,128)}', space=vmem, size = 0x1c000, scoped, tag = 'scratch operand']
  %s0 = inlined_call_operand.vmem [shape: f32[224,64], index: 0, kind: input, shape index: {}]
  %s1 = inlined_call_operand.vmem [shape: bf16[192,512], index: 1, kind: input, shape index: {}]
  %s2 = inlined_call_operand.vmem [shape: f32[1,512], index: 2, kind: input, shape index: {}]
  %s3 = inlined_call_operand.vmem [shape: bf16[640,256], index: 3, kind: input, shape index: {}]
  %s4 = inlined_call_operand.vmem [shape: f32[1,256], index: 4, kind: input, shape index: {}]
  %s5 = inlined_call_operand.vmem [shape: f32[512,50], index: 5, kind: input, shape index: {}]
  %s6 = inlined_call_operand.vmem [shape: f32[1,50], index: 6, kind: input, shape index: {}]
  %s7 = inlined_call_operand.vmem [shape: f32[50,50], index: 7, kind: input, shape index: {}]
  %s8 = inlined_call_operand.vmem [shape: f32[1,50], index: 8, kind: input, shape index: {}]
  %s9 = inlined_call_operand.hbm [shape: f32[50,128], index: 9, kind: input, shape index: {}]
  %s10 = inlined_call_operand.vmem [shape: f32[1,128], index: 10, kind: input, shape index: {}]
  %s11 = inlined_call_operand.hbm [shape: f32[16,128], index: 11, kind: output, shape index: {}]
  %s12 = sld [smem:[#allocation0]]
  $region58: #{tpu_custom_call.1} parent=0
    _
  %s14 = ssub.s32 1, %s12
  %s15 = scalar_select 0, %s14, %s12
  $region1: #{tpu_custom_call.1} parent=0
    #allocation3 [shape = 'u8[28672]{0}', space=vmem, size = 0x7000, scoped, tag = 'input window, operand 9, single buffered']
    #allocation4 [shape = 's32[1]{0}', space=sflag, size = 0x4, scoped, tag = 'scoped memory for tpu_custom_call.1']
    #allocation5 [shape = 's32[1]{0}', space=sflag, size = 0x4, scoped, tag = 'scoped memory for tpu_custom_call.1']
    #allocation6 [shape = 'u8[8192]{0}', space=vmem, size = 0x2000, scoped, tag = 'output window, operand 0, single buffered']
    %16 = vsyncpa [#allocation4], 0
    %17 = vsyncpa [#allocation5], 0
    // Predicated region
    $region2: #{tpu_custom_call.1} parent=1 // pred_check
      _
    $region3: #{tpu_custom_call.1} parent=1 // pred_check_branch
      %19 = sbr.rel (0) target = $region5
    $region4: #{tpu_custom_call.1} parent=1 // pred_region
      _
    $region5: #{tpu_custom_call.1} parent=1 // pred_fallthru
      _
    // Predicated region
    $region6: #{tpu_custom_call.1} parent=1 // pred_check
      _
    $region7: #{tpu_custom_call.1} parent=1 // pred_check_branch
      %21 = sbr.rel (0) target = $region9
    $region8: #{tpu_custom_call.1} parent=1 // pred_region
      _
    $region9: #{tpu_custom_call.1} parent=1 // pred_fallthru
      _
    // Predicated region
    $region10: #{tpu_custom_call.1} parent=1 // pred_check
      _
    $region11: #{tpu_custom_call.1} parent=1 // pred_check_branch
      %23 = sbr.rel (0) target = $region13
    $region12: #{tpu_custom_call.1} parent=1 // pred_region
      _
    $region13: #{tpu_custom_call.1} parent=1 // pred_fallthru
      _
    // Predicated region
    $region14: #{tpu_custom_call.1} parent=1 // pred_check
      _
    $region15: #{tpu_custom_call.1} parent=1 // pred_check_branch
      %25 = sbr.rel (0) target = $region17
    $region16: #{tpu_custom_call.1} parent=1 // pred_region
      _
    $region17: #{tpu_custom_call.1} parent=1 // pred_fallthru
      _
    // Predicated region
    $region18: #{tpu_custom_call.1} parent=1 // pred_check
      _
    $region19: #{tpu_custom_call.1} parent=1 // pred_check_branch
      %27 = sbr.rel (0) target = $region21
    $region20: #{tpu_custom_call.1} parent=1 // pred_region
      _
    $region21: #{tpu_custom_call.1} parent=1 // pred_fallthru
      _
    // Predicated region
    $region22: #{tpu_custom_call.1} parent=1 // pred_check
      _
    $region23: #{tpu_custom_call.1} parent=1 // pred_check_branch
      %29 = sbr.rel (0) target = $region25
    $region24: #{tpu_custom_call.1} parent=1 // pred_region
      _
    $region25: #{tpu_custom_call.1} parent=1 // pred_fallthru
      _
    // Predicated region
    $region26: #{tpu_custom_call.1} parent=1 // pred_check
      _
    $region27: #{tpu_custom_call.1} parent=1 // pred_check_branch
      %31 = sbr.rel (0) target = $region29
    $region28: #{tpu_custom_call.1} parent=1 // pred_region
      _
    $region29: #{tpu_custom_call.1} parent=1 // pred_fallthru
      _
    // Predicated region
    $region30: #{tpu_custom_call.1} parent=1 // pred_check
      _
    $region31: #{tpu_custom_call.1} parent=1 // pred_check_branch
      %33 = sbr.rel (0) target = $region33
    $region32: #{tpu_custom_call.1} parent=1 // pred_region
      _
    $region33: #{tpu_custom_call.1} parent=1 // pred_fallthru
      _
    // Predicated region
    $region34: #{tpu_custom_call.1} parent=1 // pred_check
      _
    $region35: #{tpu_custom_call.1} parent=1 // pred_check_branch
      %35 = sbr.rel (0) target = $region37
    $region36: #{tpu_custom_call.1} parent=1 // pred_region
      _
    $region37: #{tpu_custom_call.1} parent=1 // pred_fallthru
      _
    // Predicated region
    $region38: #{tpu_custom_call.1} parent=1 // pred_check
      _
    $region39: #{tpu_custom_call.1} parent=1 // pred_check_branch
      %37 = sbr.rel (0) target = $region41
    $region40: #{tpu_custom_call.1} parent=1 // pred_region
      %s39 = ssub.s32 896, 896
      %40 = vsyncadd [#allocation4], %s39
      %s41 = sshll.u32 [#allocation3], 4
      %s42 = int_to_ptr.vmem [resolvable:$true] %s41
      %47 = dma.hbm_to_vmem [thread:$0]  %s9, 896, %s42, [#allocation4], 128, 128, 8
    $region41: #{tpu_custom_call.1} parent=1 // pred_fallthru
      _
    // Predicated region
    $region42: #{tpu_custom_call.1} parent=1 // pred_check
      _
    $region43: #{tpu_custom_call.1} parent=1 // pred_check_branch
      %49 = sbr.rel (0) target = $region45
    $region44: #{tpu_custom_call.1} parent=1 // pred_region
      _
    $region45: #{tpu_custom_call.1} parent=1 // pred_fallthru
      _
    // Predicated region
    $region46: #{tpu_custom_call.1} parent=1 // pred_check
      _
    $region47: #{tpu_custom_call.1} parent=1 // pred_check_branch
      %51 = sbr.rel (0) target = $region49
    $region48: #{tpu_custom_call.1} parent=1 // pred_region
      %52 = dma.done [#allocation4], 896
    $region49: #{tpu_custom_call.1} parent=1 // pred_fallthru
      _
    %v54 = vld [vmem:[%s0] sm:$0xff]
    %v55 = vld [vmem:[%s0 + $0x8] sm:$0xff]
    %v56 = vld [vmem:[%s0 + $0x10] sm:$0xff]
    %v57 = vld [vmem:[%s0 + $0x18] sm:$0xff]
    %v58 = vld [vmem:[%s0 + $0x20] sm:$0xff]
    %v59 = vld [vmem:[%s0 + $0x28] sm:$0xff]
    %v60 = vld [vmem:[%s0 + $0x30] sm:$0xff]
    %v61 = vld [vmem:[%s0 + $0x38] sm:$0xff]
    %v62 = vld [vmem:[%s0 + $0x40] sm:$0xff]
    %v63 = vld [vmem:[%s0 + $0x48] sm:$0xff]
    %v64 = vld [vmem:[%s0 + $0x50] sm:$0xff]
    %v65 = vld [vmem:[%s0 + $0x58] sm:$0xff]
    %v66 = vld [vmem:[%s0 + $0x60] sm:$0xff]
    %v67 = vld [vmem:[%s0 + $0x68] sm:$0xff]
    %v68 = vld [vmem:[%s0 + $0x70] sm:$0xff]
    %v69 = vld [vmem:[%s0 + $0x78] sm:$0xff]
    %v70 = vld [vmem:[%s0 + $0x80] sm:$0xff]
    %v71 = vld [vmem:[%s0 + $0x88] sm:$0xff]
    %v72 = vld [vmem:[%s0 + $0x90] sm:$0xff]
    %v73 = vld [vmem:[%s0 + $0x98] sm:$0xff]
    %v74 = vld [vmem:[%s0 + $0xa0] sm:$0xff]
    %v75 = vld [vmem:[%s0 + $0xa8] sm:$0xff]
    %v76 = vld [vmem:[%s0 + $0xb0] sm:$0xff]
    %v77 = vld [vmem:[%s0 + $0xb8] sm:$0xff]
    %v78 = vld [vmem:[%s0 + $0xc0] sm:$0xff]
    %v79 = vld [vmem:[%s0 + $0xc8] sm:$0xff]
    %v80 = vld [vmem:[%s0 + $0xd0] sm:$0xff]
    %v81 = vld [vmem:[%s0 + $0xd8] sm:$0xff]
    %v82 = vrot.slane %v54, 1
    %v83 = vrot.slane %v55, 1
    %v84 = vrot.slane %v56, 1
    %v85 = vrot.slane %v57, 1
    %v86 = vrot.slane %v58, 1
    %v87 = vrot.slane %v59, 1
    %v88 = vrot.slane %v60, 1
    %v89 = vrot.slane %v61, 1
    %v90 = vrot.slane %v62, 1
    %v91 = vrot.slane %v63, 1
    %v92 = vrot.slane %v64, 1
    %v93 = vrot.slane %v65, 1
    %v94 = vrot.slane %v66, 1
    %v95 = vrot.slane %v67, 1
    %v96 = vrot.slane %v68, 1
    %v97 = vrot.slane %v69, 1
    %v98 = vrot.slane %v70, 1
    %v99 = vrot.slane %v71, 1
    %v100 = vrot.slane %v72, 1
    %v101 = vrot.slane %v73, 1
    %v102 = vrot.slane %v74, 1
    %v103 = vrot.slane %v75, 1
    %v104 = vrot.slane %v76, 1
    %v105 = vrot.slane %v77, 1
    %v106 = vrot.slane %v78, 1
    %v107 = vrot.slane %v79, 1
    %v108 = vrot.slane %v80, 1
    %v109 = vrot.slane %v81, 1
    %v110 = vlaneseq
    %v111 = vshrl.u32 %v110, 7
    %vm112 = vcmp.lt.s32.totalorder %v111, 7
    %v113 = vsel %vm112, %v108, %v109
    %v114 = vsel %vm112, %v107, %v108
    %v115 = vsel %vm112, %v106, %v107
    %v116 = vsel %vm112, %v105, %v106
    %v117 = vsel %vm112, %v104, %v105
    %v118 = vsel %vm112, %v103, %v104
    %v119 = vsel %vm112, %v102, %v103
    %v120 = vsel %vm112, %v101, %v102
    %v121 = vsel %vm112, %v100, %v101
    %v122 = vsel %vm112, %v99, %v100
    %v123 = vsel %vm112, %v98, %v99
    %v124 = vsel %vm112, %v97, %v98
    %v125 = vsel %vm112, %v96, %v97
    %v126 = vsel %vm112, %v95, %v96
    %v127 = vsel %vm112, %v94, %v95
    %v128 = vsel %vm112, %v93, %v94
    %v129 = vsel %vm112, %v92, %v93
    %v130 = vsel %vm112, %v91, %v92
    %v131 = vsel %vm112, %v90, %v91
    %v132 = vsel %vm112, %v89, %v90
    %v133 = vsel %vm112, %v88, %v89
    %v134 = vsel %vm112, %v87, %v88
    %v135 = vsel %vm112, %v86, %v87
    %v136 = vsel %vm112, %v85, %v86
    %v137 = vsel %vm112, %v84, %v85
    %v138 = vsel %vm112, %v83, %v84
    %v139 = vsel %vm112, %v82, %v83
    %v140 = vsel %vm112, %v109, %v82
    %v141 = vrot.slane %v54, 2
    %v142 = vrot.slane %v55, 2
    %v143 = vrot.slane %v56, 2
    %v144 = vrot.slane %v57, 2
    %v145 = vrot.slane %v58, 2
    %v146 = vrot.slane %v59, 2
    %v147 = vrot.slane %v60, 2
    %v148 = vrot.slane %v61, 2
    %v149 = vrot.slane %v62, 2
    %v150 = vrot.slane %v63, 2
    %v151 = vrot.slane %v64, 2
    %v152 = vrot.slane %v65, 2
    %v153 = vrot.slane %v66, 2
    %v154 = vrot.slane %v67, 2
    %v155 = vrot.slane %v68, 2
    %v156 = vrot.slane %v69, 2
    %v157 = vrot.slane %v70, 2
    %v158 = vrot.slane %v71, 2
    %v159 = vrot.slane %v72, 2
    %v160 = vrot.slane %v73, 2
    %v161 = vrot.slane %v74, 2
    %v162 = vrot.slane %v75, 2
    %v163 = vrot.slane %v76, 2
    %v164 = vrot.slane %v77, 2
    %v165 = vrot.slane %v78, 2
    %v166 = vrot.slane %v79, 2
    %v167 = vrot.slane %v80, 2
    %v168 = vrot.slane %v81, 2
    %vm169 = vcmp.lt.s32.totalorder %v111, 6
    %v170 = vsel %vm169, %v167, %v168
    %v171 = vsel %vm169, %v166, %v167
    %v172 = vsel %vm169, %v165, %v166
    %v173 = vsel %vm169, %v164, %v165
    %v174 = vsel %vm169, %v163, %v164
    %v175 = vsel %vm169, %v162, %v163
    %v176 = vsel %vm169, %v161, %v162
    %v177 = vsel %vm169, %v160, %v161
    %v178 = vsel %vm169, %v159, %v160
    %v179 = vsel %vm169, %v158, %v159
    %v180 = vsel %vm169, %v157, %v158
    %v181 = vsel %vm169, %v156, %v157
    %v182 = vsel %vm169, %v155, %v156
    %v183 = vsel %vm169, %v154, %v155
    %v184 = vsel %vm169, %v153, %v154
    %v185 = vsel %vm169, %v152, %v153
    %v186 = vsel %vm169, %v151, %v152
    %v187 = vsel %vm169, %v150, %v151
    %v188 = vsel %vm169, %v149, %v150
    %v189 = vsel %vm169, %v148, %v149
    %v190 = vsel %vm169, %v147, %v148
    %v191 = vsel %vm169, %v146, %v147
    %v192 = vsel %vm169, %v145, %v146
    %v193 = vsel %vm169, %v144, %v145
    %v194 = vsel %vm169, %v143, %v144
    %v195 = vsel %vm169, %v142, %v143
    %v196 = vsel %vm169, %v141, %v142
    %v197 = vsel %vm169, %v168, %v141
    %226 = vrot.lane.b32.xlu0 %v139, 64
    %v227 = vpop.permute.xlu0 %226
    %228 = vrot.lane.b32.xlu0 %v138, 64
    %v229 = vpop.permute.xlu0 %228
    %230 = vrot.lane.b32.xlu0 %v137, 64
    %v231 = vpop.permute.xlu0 %230
    %232 = vrot.lane.b32.xlu0 %v136, 64
    %v233 = vpop.permute.xlu0 %232
    %234 = vrot.lane.b32.xlu0 %v135, 64
    %v235 = vpop.permute.xlu0 %234
    %236 = vrot.lane.b32.xlu0 %v134, 64
    %v237 = vpop.permute.xlu0 %236
    %238 = vrot.lane.b32.xlu0 %v133, 64
    %v239 = vpop.permute.xlu0 %238
    %240 = vrot.lane.b32.xlu0 %v132, 64
    %v241 = vpop.permute.xlu0 %240
    %242 = vrot.lane.b32.xlu0 %v131, 64
    %v243 = vpop.permute.xlu0 %242
    %244 = vrot.lane.b32.xlu0 %v130, 64
    %v245 = vpop.permute.xlu0 %244
    %246 = vrot.lane.b32.xlu0 %v129, 64
    %v247 = vpop.permute.xlu0 %246
    %248 = vrot.lane.b32.xlu0 %v128, 64
    %v249 = vpop.permute.xlu0 %248
    %250 = vrot.lane.b32.xlu0 %v127, 64
    %v251 = vpop.permute.xlu0 %250
    %252 = vrot.lane.b32.xlu0 %v126, 64
    %v253 = vpop.permute.xlu0 %252
    %254 = vrot.lane.b32.xlu0 %v125, 64
    %v255 = vpop.permute.xlu0 %254
    %256 = vrot.lane.b32.xlu0 %v124, 64
    %v257 = vpop.permute.xlu0 %256
    %258 = vrot.lane.b32.xlu0 %v123, 64
    %v259 = vpop.permute.xlu0 %258
    %260 = vrot.lane.b32.xlu0 %v122, 64
    %v261 = vpop.permute.xlu0 %260
    %262 = vrot.lane.b32.xlu0 %v121, 64
    %v263 = vpop.permute.xlu0 %262
    %264 = vrot.lane.b32.xlu0 %v120, 64
    %v265 = vpop.permute.xlu0 %264
    %266 = vrot.lane.b32.xlu0 %v119, 64
    %v267 = vpop.permute.xlu0 %266
    %268 = vrot.lane.b32.xlu0 %v118, 64
    %v269 = vpop.permute.xlu0 %268
    %270 = vrot.lane.b32.xlu0 %v117, 64
    %v271 = vpop.permute.xlu0 %270
    %272 = vrot.lane.b32.xlu0 %v116, 64
    %v273 = vpop.permute.xlu0 %272
    %274 = vrot.lane.b32.xlu0 %v115, 64
    %v275 = vpop.permute.xlu0 %274
    %276 = vrot.lane.b32.xlu0 %v114, 64
    %v277 = vpop.permute.xlu0 %276
    %278 = vrot.lane.b32.xlu0 %v113, 64
    %v279 = vpop.permute.xlu0 %278
    %280 = vrot.lane.b32.xlu0 %v140, 64
    %v281 = vpop.permute.xlu0 %280
    %vm310 = vcmask 523264
    %v311 = vsel %vm310, %v54, %v227
    %v312 = vsel %vm310, %v55, %v229
    %v313 = vsel %vm310, %v56, %v231
    %v314 = vsel %vm310, %v57, %v233
    %v315 = vsel %vm310, %v58, %v235
    %v316 = vsel %vm310, %v59, %v237
    %v317 = vsel %vm310, %v60, %v239
    %v318 = vsel %vm310, %v61, %v241
    %v319 = vsel %vm310, %v62, %v243
    %v320 = vsel %vm310, %v63, %v245
    %v321 = vsel %vm310, %v64, %v247
    %v322 = vsel %vm310, %v65, %v249
    %v323 = vsel %vm310, %v66, %v251
    %v324 = vsel %vm310, %v67, %v253
    %v325 = vsel %vm310, %v68, %v255
    %v326 = vsel %vm310, %v69, %v257
    %v327 = vsel %vm310, %v70, %v259
    %v328 = vsel %vm310, %v71, %v261
    %v329 = vsel %vm310, %v72, %v263
    %v330 = vsel %vm310, %v73, %v265
    %v331 = vsel %vm310, %v74, %v267
    %v332 = vsel %vm310, %v75, %v269
    %v333 = vsel %vm310, %v76, %v271
    %v334 = vsel %vm310, %v77, %v273
    %v335 = vsel %vm310, %v78, %v275
    %v336 = vsel %vm310, %v79, %v277
    %v337 = vsel %vm310, %v80, %v279
    %v338 = vsel %vm310, %v81, %v281
    %v339 = vpack.c.bf16 %v312, %v311
    %v340 = vpack.c.bf16 %v195, %v196
    %v341 = vpack.c.bf16 %v314, %v313
    %v342 = vpack.c.bf16 %v193, %v194
    %v343 = vpack.c.bf16 %v316, %v315
    %v344 = vpack.c.bf16 %v191, %v192
    %v345 = vpack.c.bf16 %v318, %v317
    %v346 = vpack.c.bf16 %v189, %v190
    %v347 = vpack.c.bf16 %v320, %v319
    %v348 = vpack.c.bf16 %v187, %v188
    %v349 = vpack.c.bf16 %v322, %v321
    %v350 = vpack.c.bf16 %v185, %v186
    %v351 = vpack.c.bf16 %v324, %v323
    %v352 = vpack.c.bf16 %v183, %v184
    %v353 = vpack.c.bf16 %v326, %v325
    %v354 = vpack.c.bf16 %v181, %v182
    %v355 = vpack.c.bf16 %v328, %v327
    %v356 = vpack.c.bf16 %v179, %v180
    %v357 = vpack.c.bf16 %v330, %v329
    %v358 = vpack.c.bf16 %v177, %v178
    %v359 = vpack.c.bf16 %v332, %v331
    %v360 = vpack.c.bf16 %v175, %v176
    %v361 = vpack.c.bf16 %v334, %v333
    %v362 = vpack.c.bf16 %v173, %v174
    %v363 = vpack.c.bf16 %v336, %v335
    %v364 = vpack.c.bf16 %v171, %v172
    %v365 = vpack.c.bf16 %v338, %v337
    %v366 = vpack.c.bf16 %v197, %v170
    %v367 = vld [vmem:[%s1] sm:$0xff]
    %v368 = vld [vmem:[%s1 + $0x8] sm:$0xff]
    %v369 = vld [vmem:[%s1 + $0x10] sm:$0xff]
    %v370 = vld [vmem:[%s1 + $0x18] sm:$0xff]
    %v371 = vld [vmem:[%s1 + $0x20] sm:$0xff]
    %v372 = vld [vmem:[%s1 + $0x28] sm:$0xff]
    %v373 = vld [vmem:[%s1 + $0x30] sm:$0xff]
    %v374 = vld [vmem:[%s1 + $0x38] sm:$0xff]
    %v375 = vld [vmem:[%s1 + $0x40] sm:$0xff]
    %v376 = vld [vmem:[%s1 + $0x48] sm:$0xff]
    %v377 = vld [vmem:[%s1 + $0x50] sm:$0xff]
    %v378 = vld [vmem:[%s1 + $0x58] sm:$0xff]
    %v379 = vld [vmem:[%s1 + $0x60] sm:$0xff]
    %v380 = vld [vmem:[%s1 + $0x68] sm:$0xff]
    %v381 = vld [vmem:[%s1 + $0x70] sm:$0xff]
    %v382 = vld [vmem:[%s1 + $0x78] sm:$0xff]
    %v383 = vld [vmem:[%s1 + $0x80] sm:$0xff]
    %v384 = vld [vmem:[%s1 + $0x88] sm:$0xff]
    %v385 = vld [vmem:[%s1 + $0x90] sm:$0xff]
    %v386 = vld [vmem:[%s1 + $0x98] sm:$0xff]
    %v387 = vld [vmem:[%s1 + $0xa0] sm:$0xff]
    %v388 = vld [vmem:[%s1 + $0xa8] sm:$0xff]
    %v389 = vld [vmem:[%s1 + $0xb0] sm:$0xff]
    %v390 = vld [vmem:[%s1 + $0xb8] sm:$0xff]
    %v391 = vld [vmem:[%s1 + $0xc0] sm:$0xff]
    %v392 = vld [vmem:[%s1 + $0xc8] sm:$0xff]
    %v393 = vld [vmem:[%s1 + $0xd0] sm:$0xff]
    %v394 = vld [vmem:[%s1 + $0xd8] sm:$0xff]
    %v395 = vld [vmem:[%s1 + $0xe0] sm:$0xff]
    %v396 = vld [vmem:[%s1 + $0xe8] sm:$0xff]
    %v397 = vld [vmem:[%s1 + $0xf0] sm:$0xff]
    %v398 = vld [vmem:[%s1 + $0xf8] sm:$0xff]
    %v399 = vld [vmem:[%s1 + $0x100] sm:$0xff]
    %v400 = vld [vmem:[%s1 + $0x108] sm:$0xff]
    %v401 = vld [vmem:[%s1 + $0x110] sm:$0xff]
    %v402 = vld [vmem:[%s1 + $0x118] sm:$0xff]
    %v403 = vld [vmem:[%s1 + $0x120] sm:$0xff]
    %v404 = vld [vmem:[%s1 + $0x128] sm:$0xff]
    %v405 = vld [vmem:[%s1 + $0x130] sm:$0xff]
    %v406 = vld [vmem:[%s1 + $0x138] sm:$0xff]
    %v407 = vld [vmem:[%s1 + $0x140] sm:$0xff]
    %v408 = vld [vmem:[%s1 + $0x148] sm:$0xff]
    %v409 = vld [vmem:[%s1 + $0x150] sm:$0xff]
    %v410 = vld [vmem:[%s1 + $0x158] sm:$0xff]
    %v411 = vld [vmem:[%s1 + $0x160] sm:$0xff]
    %v412 = vld [vmem:[%s1 + $0x168] sm:$0xff]
    %v413 = vld [vmem:[%s1 + $0x170] sm:$0xff]
    %v414 = vld [vmem:[%s1 + $0x178] sm:$0xff]
    %v415 = vld [vmem:[%s2] sm:$0xf]
    %v417 = vlaneseq
    %v418 = vshrl.u32 %v417, 7
    %v419 = vsub.s32 0, %v418
    %v420 = vrot.slane %v415, %v419
    %v421 = vlaneseq
    %v422 = vshrl.u32 %v421, 7
    %v423 = vsub.s32 1, %v422
    %v424 = vrot.slane %v415, %v423
    %v425 = vlaneseq
    %v426 = vshrl.u32 %v425, 7
    %v427 = vsub.s32 2, %v426
    %v428 = vrot.slane %v415, %v427
    %v429 = vlaneseq
    %v430 = vshrl.u32 %v429, 7
    %v431 = vsub.s32 3, %v430
    %v432 = vrot.slane %v415, %v431
    %v485 = vunpack.c.l.b16 %v367
    %v486 = vunpack.c.h.b16 %v367
    %v487 = vunpack.c.l.b16 %v368
    %v488 = vunpack.c.h.b16 %v368
    %v489 = vunpack.c.l.b16 %v369
    %v490 = vunpack.c.h.b16 %v369
    %v491 = vunpack.c.l.b16 %v370
    %v492 = vunpack.c.h.b16 %v370
    %v493 = vunpack.c.l.b16 %v371
    %v494 = vunpack.c.h.b16 %v371
    %v495 = vunpack.c.l.b16 %v372
    %v496 = vunpack.c.h.b16 %v372
    %v497 = vunpack.c.l.b16 %v373
    %v498 = vunpack.c.h.b16 %v373
    %v499 = vunpack.c.l.b16 %v374
    %v500 = vunpack.c.h.b16 %v374
    %v501 = vunpack.c.l.b16 %v375
    %v502 = vunpack.c.h.b16 %v375
    %v503 = vunpack.c.l.b16 %v376
    %v504 = vunpack.c.h.b16 %v376
    %v505 = vunpack.c.l.b16 %v377
    %v506 = vunpack.c.h.b16 %v377
    %v507 = vunpack.c.l.b16 %v378
    %v508 = vunpack.c.h.b16 %v378
    %v509 = vunpack.c.l.b16 %v379
    %v510 = vunpack.c.h.b16 %v379
    %v511 = vunpack.c.l.b16 %v380
    %v512 = vunpack.c.h.b16 %v380
    %v513 = vunpack.c.l.b16 %v381
    %v514 = vunpack.c.h.b16 %v381
    %v515 = vunpack.c.l.b16 %v382
    %v516 = vunpack.c.h.b16 %v382
    %v517 = vunpack.c.l.b16 %v383
    %v518 = vunpack.c.h.b16 %v383
    %v519 = vunpack.c.l.b16 %v384
    %v520 = vunpack.c.h.b16 %v384
    %v521 = vunpack.c.l.b16 %v385
    %v522 = vunpack.c.h.b16 %v385
    %v523 = vunpack.c.l.b16 %v386
    %v524 = vunpack.c.h.b16 %v386
    %v525 = vunpack.c.l.b16 %v387
    %v526 = vunpack.c.h.b16 %v387
    %v527 = vunpack.c.l.b16 %v388
    %v528 = vunpack.c.h.b16 %v388
    %v529 = vunpack.c.l.b16 %v389
    %v530 = vunpack.c.h.b16 %v389
    %v531 = vunpack.c.l.b16 %v390
    %v532 = vunpack.c.h.b16 %v390
    %v533 = vunpack.c.l.b16 %v391
    %v534 = vunpack.c.h.b16 %v391
    %v535 = vunpack.c.l.b16 %v392
    %v536 = vunpack.c.h.b16 %v392
    %v537 = vunpack.c.l.b16 %v393
    %v538 = vunpack.c.h.b16 %v393
    %v539 = vunpack.c.l.b16 %v394
    %v540 = vunpack.c.h.b16 %v394
    %v541 = vunpack.c.l.b16 %v395
    %v542 = vunpack.c.h.b16 %v395
    %v543 = vunpack.c.l.b16 %v396
    %v544 = vunpack.c.h.b16 %v396
    %v545 = vunpack.c.l.b16 %v397
    %v546 = vunpack.c.h.b16 %v397
    %v547 = vunpack.c.l.b16 %v398
    %v548 = vunpack.c.h.b16 %v398
    %v549 = vunpack.c.l.b16 %v399
    %v550 = vunpack.c.h.b16 %v399
    %v551 = vunpack.c.l.b16 %v400
    %v552 = vunpack.c.h.b16 %v400
    %v553 = vunpack.c.l.b16 %v401
    %v554 = vunpack.c.h.b16 %v401
    %v555 = vunpack.c.l.b16 %v402
    %v556 = vunpack.c.h.b16 %v402
    %v557 = vunpack.c.l.b16 %v403
    %v558 = vunpack.c.h.b16 %v403
    %v559 = vunpack.c.l.b16 %v404
    %v560 = vunpack.c.h.b16 %v404
    %v561 = vunpack.c.l.b16 %v405
    %v562 = vunpack.c.h.b16 %v405
    %v563 = vunpack.c.l.b16 %v406
    %v564 = vunpack.c.h.b16 %v406
    %v565 = vunpack.c.l.b16 %v407
    %v566 = vunpack.c.h.b16 %v407
    %v567 = vunpack.c.l.b16 %v408
    %v568 = vunpack.c.h.b16 %v408
    %v569 = vunpack.c.l.b16 %v409
    %v570 = vunpack.c.h.b16 %v409
    %v571 = vunpack.c.l.b16 %v410
    %v572 = vunpack.c.h.b16 %v410
    %v573 = vunpack.c.l.b16 %v411
    %v574 = vunpack.c.h.b16 %v411
    %v575 = vunpack.c.l.b16 %v412
    %v576 = vunpack.c.h.b16 %v412
    %v577 = vunpack.c.l.b16 %v413
    %v578 = vunpack.c.h.b16 %v413
    %v579 = vunpack.c.l.b16 %v414
    %v580 = vunpack.c.h.b16 %v414
    %v581 = vpack.c.b16 %v489, %v485
    %v582 = vpack.c.b16 %v490, %v486
    %v583 = vpack.c.b16 %v491, %v487
    %v584 = vpack.c.b16 %v492, %v488
    %v585 = vpack.c.b16 %v497, %v493
    %v586 = vpack.c.b16 %v498, %v494
    %v587 = vpack.c.b16 %v499, %v495
    %v588 = vpack.c.b16 %v500, %v496
    %v589 = vpack.c.b16 %v505, %v501
    %v590 = vpack.c.b16 %v506, %v502
    %v591 = vpack.c.b16 %v507, %v503
    %v592 = vpack.c.b16 %v508, %v504
    %v593 = vpack.c.b16 %v513, %v509
    %v594 = vpack.c.b16 %v514, %v510
    %v595 = vpack.c.b16 %v515, %v511
    %v596 = vpack.c.b16 %v516, %v512
    %v597 = vpack.c.b16 %v521, %v517
    %v598 = vpack.c.b16 %v522, %v518
    %v599 = vpack.c.b16 %v523, %v519
    %v600 = vpack.c.b16 %v524, %v520
    %v601 = vpack.c.b16 %v529, %v525
    %v602 = vpack.c.b16 %v530, %v526
    %v603 = vpack.c.b16 %v531, %v527
    %v604 = vpack.c.b16 %v532, %v528
    %v605 = vpack.c.b16 %v537, %v533
    %v606 = vpack.c.b16 %v538, %v534
    %v607 = vpack.c.b16 %v539, %v535
    %v608 = vpack.c.b16 %v540, %v536
    %v609 = vpack.c.b16 %v545, %v541
    %v610 = vpack.c.b16 %v546, %v542
    %v611 = vpack.c.b16 %v547, %v543
    %v612 = vpack.c.b16 %v548, %v544
    %v613 = vpack.c.b16 %v553, %v549
    %v614 = vpack.c.b16 %v554, %v550
    %v615 = vpack.c.b16 %v555, %v551
    %v616 = vpack.c.b16 %v556, %v552
    %v617 = vpack.c.b16 %v561, %v557
    %v618 = vpack.c.b16 %v562, %v558
    %v619 = vpack.c.b16 %v563, %v559
    %v620 = vpack.c.b16 %v564, %v560
    %v621 = vpack.c.b16 %v569, %v565
    %v622 = vpack.c.b16 %v570, %v566
    %v623 = vpack.c.b16 %v571, %v567
    %v624 = vpack.c.b16 %v572, %v568
    %v625 = vpack.c.b16 %v577, %v573
    %v626 = vpack.c.b16 %v578, %v574
    %v627 = vpack.c.b16 %v579, %v575
    %v628 = vpack.c.b16 %v580, %v576
    %v678 = vsel %vm310, %v340, 0
    %v681 = vsel %vm310, %v342, 0
    %v684 = vsel %vm310, %v344, 0
    %v687 = vsel %vm310, %v346, 0
    %v690 = vsel %vm310, %v348, 0
    %v693 = vsel %vm310, %v350, 0
    %v696 = vsel %vm310, %v352, 0
    %v699 = vsel %vm310, %v354, 0
    %v702 = vsel %vm310, %v356, 0
    %v705 = vsel %vm310, %v358, 0
    %v708 = vsel %vm310, %v360, 0
    %v711 = vsel %vm310, %v362, 0
    %v714 = vsel %vm310, %v364, 0
    %v717 = vsel %vm310, %v366, 0
    %719 = vmatprep.subr.bf16.mxu0 %v582
    %720 = vmatpush1.bf16.msra.mxu0 %v581
    %721 = vmatprep.subr.bf16.mxu0 %v586
    %722 = vmatpush1.bf16.msra.mxu0 %v585
    %723 = vmatprep.subr.bf16.mxu0 %v590
    %724 = vmatpush1.bf16.msra.mxu0 %v589
    %725 = vmatprep.subr.bf16.mxu0 %v594
    %726 = vmatpush1.bf16.msra.mxu0 %v593
    %727 = vmatprep.subr.bf16.mxu0 %v598
    %728 = vmatpush1.bf16.msra.mxu0 %v597
    %729 = vmatprep.subr.bf16.mxu0 %v602
    %730 = vmatpush1.bf16.msra.mxu0 %v601
    %731 = vmatprep.subr.bf16.mxu0 %v606
    %732 = vmatpush1.bf16.msra.mxu0 %v605
    %733 = vmatprep.subr.bf16.mxu0 %v610
    %734 = vmatpush1.bf16.msra.mxu0 %v609
    %735 = vmatprep.subr.bf16.mxu0 %v614
    %736 = vmatpush1.bf16.msra.mxu0 %v613
    %737 = vmatprep.subr.bf16.mxu0 %v618
    %738 = vmatpush1.bf16.msra.mxu0 %v617
    %739 = vmatprep.subr.bf16.mxu0 %v622
    %740 = vmatpush1.bf16.msra.mxu0 %v621
    %741 = vmatprep.subr.bf16.mxu0 %v626
    %742 = vmatpush1.bf16.msra.mxu0 %v625
    %743 = vmatprep.subr.bf16.mxu0 0
    %744 = vmatpush1.bf16.msra.mxu0 0
    %745 = vmatprep.subr.bf16.mxu0 0
    %746 = vmatpush1.bf16.msra.mxu0 0
    %747 = vmatprep.subr.bf16.mxu0 0
    %748 = vmatpush1.bf16.msra.mxu0 0
    %749 = vmatprep.subr.bf16.mxu0 0
    %750 = vmatpush1.bf16.msra.mxu0 0
    %751 = vmatprep.mubr.bf16.mxu0 %v678
    %752 = vmatmul.mubr.bf16.gmra.mrb[0].mxu0 %v339
    %v753 = vpop.f32.mrb[0].mxu0
    %v754 = vadd.f32 %v420, %v753
    %v755 = vpop.f32.mrb[0].mxu0
    %v756 = vadd.f32 %v424, %v755
    %v757 = vpop.f32.mrb[0].mxu0
    %v758 = vadd.f32 %v420, %v757
    %v759 = vpop.f32.mrb[0].mxu0
    %v760 = vadd.f32 %v424, %v759
    %761 = vmatprep.mubr.bf16.mxu0 %v681
    %762 = vmatmul.mubr.bf16.gmra.mrb[0].mxu0 %v341
    %v763 = vpop.f32.mrb[0].mxu0
    %v764 = vadd.f32 %v420, %v763
    %v765 = vpop.f32.mrb[0].mxu0
    %v766 = vadd.f32 %v424, %v765
    %v767 = vpop.f32.mrb[0].mxu0
    %v768 = vadd.f32 %v420, %v767
    %v769 = vpop.f32.mrb[0].mxu0
    %v770 = vadd.f32 %v424, %v769
    %771 = vmatprep.mubr.bf16.mxu0 %v684
    %772 = vmatmul.mubr.bf16.gmra.mrb[0].mxu0 %v343
    %v773 = vpop.f32.mrb[0].mxu0
    %v774 = vadd.f32 %v420, %v773
    %v775 = vpop.f32.mrb[0].mxu0
    %v776 = vadd.f32 %v424, %v775
    %v777 = vpop.f32.mrb[0].mxu0
    %v778 = vadd.f32 %v420, %v777
    %v779 = vpop.f32.mrb[0].mxu0
    %v780 = vadd.f32 %v424, %v779
    %781 = vmatprep.mubr.bf16.mxu0 %v687
    %782 = vmatmul.mubr.bf16.gmra.mrb[0].mxu0 %v345
    %v783 = vpop.f32.mrb[0].mxu0
    %v784 = vadd.f32 %v420, %v783
    %v785 = vpop.f32.mrb[0].mxu0
    %v786 = vadd.f32 %v424, %v785
    %v787 = vpop.f32.mrb[0].mxu0
    %v788 = vadd.f32 %v420, %v787
    %v789 = vpop.f32.mrb[0].mxu0
    %v790 = vadd.f32 %v424, %v789
    %791 = vmatprep.mubr.bf16.mxu0 %v690
    %792 = vmatmul.mubr.bf16.gmra.mrb[0].mxu0 %v347
    %v793 = vpop.f32.mrb[0].mxu0
    %v794 = vadd.f32 %v420, %v793
    %v795 = vpop.f32.mrb[0].mxu0
    %v796 = vadd.f32 %v424, %v795
    %v797 = vpop.f32.mrb[0].mxu0
    %v798 = vadd.f32 %v420, %v797
    %v799 = vpop.f32.mrb[0].mxu0
    %v800 = vadd.f32 %v424, %v799
    %801 = vmatprep.mubr.bf16.mxu0 %v693
    %802 = vmatmul.mubr.bf16.gmra.mrb[0].mxu0 %v349
    %v803 = vpop.f32.mrb[0].mxu0
    %v804 = vadd.f32 %v420, %v803
    %v805 = vpop.f32.mrb[0].mxu0
    %v806 = vadd.f32 %v424, %v805
    %v807 = vpop.f32.mrb[0].mxu0
    %v808 = vadd.f32 %v420, %v807
    %v809 = vpop.f32.mrb[0].mxu0
    %v810 = vadd.f32 %v424, %v809
    %811 = vmatprep.mubr.bf16.mxu0 %v696
    %812 = vmatmul.mubr.bf16.gmra.mrb[0].mxu0 %v351
    %v813 = vpop.f32.mrb[0].mxu0
    %v814 = vadd.f32 %v420, %v813
    %v815 = vpop.f32.mrb[0].mxu0
    %v816 = vadd.f32 %v424, %v815
    %v817 = vpop.f32.mrb[0].mxu0
    %v818 = vadd.f32 %v420, %v817
    %v819 = vpop.f32.mrb[0].mxu0
    %v820 = vadd.f32 %v424, %v819
    %821 = vmatprep.mubr.bf16.mxu0 %v699
    %822 = vmatmul.mubr.bf16.gmra.mrb[0].mxu0 %v353
    %v823 = vpop.f32.mrb[0].mxu0
    %v824 = vadd.f32 %v420, %v823
    %v825 = vpop.f32.mrb[0].mxu0
    %v826 = vadd.f32 %v424, %v825
    %v827 = vpop.f32.mrb[0].mxu0
    %v828 = vadd.f32 %v420, %v827
    %v829 = vpop.f32.mrb[0].mxu0
    %v830 = vadd.f32 %v424, %v829
    %831 = vmatprep.mubr.bf16.mxu0 %v702
    %832 = vmatmul.mubr.bf16.gmra.mrb[0].mxu0 %v355
    %v833 = vpop.f32.mrb[0].mxu0
    %v834 = vadd.f32 %v420, %v833
    %v835 = vpop.f32.mrb[0].mxu0
    %v836 = vadd.f32 %v424, %v835
    %v837 = vpop.f32.mrb[0].mxu0
    %v838 = vadd.f32 %v420, %v837
    %v839 = vpop.f32.mrb[0].mxu0
    %v840 = vadd.f32 %v424, %v839
    %841 = vmatprep.mubr.bf16.mxu0 %v705
    %842 = vmatmul.mubr.bf16.gmra.mrb[0].mxu0 %v357
    %v843 = vpop.f32.mrb[0].mxu0
    %v844 = vadd.f32 %v420, %v843
    %v845 = vpop.f32.mrb[0].mxu0
    %v846 = vadd.f32 %v424, %v845
    %v847 = vpop.f32.mrb[0].mxu0
    %v848 = vadd.f32 %v420, %v847
    %v849 = vpop.f32.mrb[0].mxu0
    %v850 = vadd.f32 %v424, %v849
    %851 = vmatprep.mubr.bf16.mxu0 %v708
    %852 = vmatmul.mubr.bf16.gmra.mrb[0].mxu0 %v359
    %v853 = vpop.f32.mrb[0].mxu0
    %v854 = vadd.f32 %v420, %v853
    %v855 = vpop.f32.mrb[0].mxu0
    %v856 = vadd.f32 %v424, %v855
    %v857 = vpop.f32.mrb[0].mxu0
    %v858 = vadd.f32 %v420, %v857
    %v859 = vpop.f32.mrb[0].mxu0
    %v860 = vadd.f32 %v424, %v859
    %861 = vmatprep.mubr.bf16.mxu0 %v711
    %862 = vmatmul.mubr.bf16.gmra.mrb[0].mxu0 %v361
    %v863 = vpop.f32.mrb[0].mxu0
    %v864 = vadd.f32 %v420, %v863
    %v865 = vpop.f32.mrb[0].mxu0
    %v866 = vadd.f32 %v424, %v865
    %v867 = vpop.f32.mrb[0].mxu0
    %v868 = vadd.f32 %v420, %v867
    %v869 = vpop.f32.mrb[0].mxu0
    %v870 = vadd.f32 %v424, %v869
    %871 = vmatprep.mubr.bf16.mxu0 %v714
    %872 = vmatmul.mubr.bf16.gmra.mrb[0].mxu0 %v363
    %v873 = vpop.f32.mrb[0].mxu0
    %v874 = vadd.f32 %v420, %v873
    %v875 = vpop.f32.mrb[0].mxu0
    %v876 = vadd.f32 %v424, %v875
    %v877 = vpop.f32.mrb[0].mxu0
    %v878 = vadd.f32 %v420, %v877
    %v879 = vpop.f32.mrb[0].mxu0
    %v880 = vadd.f32 %v424, %v879
    %881 = vmatprep.mubr.bf16.mxu0 %v717
    %882 = vmatmul.mubr.bf16.gmra.mrb[0].mxu0 %v365
    %v883 = vpop.f32.mrb[0].mxu0
    %v884 = vadd.f32 %v420, %v883
    %v885 = vpop.f32.mrb[0].mxu0
    %v886 = vadd.f32 %v424, %v885
    %v887 = vpop.f32.mrb[0].mxu0
    %v888 = vadd.f32 %v420, %v887
    %v889 = vpop.f32.mrb[0].mxu0
    %v890 = vadd.f32 %v424, %v889
    %891 = vdwg.mxu0
    %892 = vmatprep.subr.bf16.mxu0 %v584
    %893 = vmatpush1.bf16.msra.mxu0 %v583
    %894 = vmatprep.subr.bf16.mxu0 %v588
    %895 = vmatpush1.bf16.msra.mxu0 %v587
    %896 = vmatprep.subr.bf16.mxu0 %v592
    %897 = vmatpush1.bf16.msra.mxu0 %v591
    %898 = vmatprep.subr.bf16.mxu0 %v596
    %899 = vmatpush1.bf16.msra.mxu0 %v595
    %900 = vmatprep.subr.bf16.mxu0 %v600
    %901 = vmatpush1.bf16.msra.mxu0 %v599
    %902 = vmatprep.subr.bf16.mxu0 %v604
    %903 = vmatpush1.bf16.msra.mxu0 %v603
    %904 = vmatprep.subr.bf16.mxu0 %v608
    %905 = vmatpush1.bf16.msra.mxu0 %v607
    %906 = vmatprep.subr.bf16.mxu0 %v612
    %907 = vmatpush1.bf16.msra.mxu0 %v611
    %908 = vmatprep.subr.bf16.mxu0 %v616
    %909 = vmatpush1.bf16.msra.mxu0 %v615
    %910 = vmatprep.subr.bf16.mxu0 %v620
    %911 = vmatpush1.bf16.msra.mxu0 %v619
    %912 = vmatprep.subr.bf16.mxu0 %v624
    %913 = vmatpush1.bf16.msra.mxu0 %v623
    %914 = vmatprep.subr.bf16.mxu0 %v628
    %915 = vmatpush1.bf16.msra.mxu0 %v627
    %916 = vmatprep.subr.bf16.mxu0 0
    %917 = vmatpush1.bf16.msra.mxu0 0
    %918 = vmatprep.subr.bf16.mxu0 0
    %919 = vmatpush1.bf16.msra.mxu0 0
    %920 = vmatprep.subr.bf16.mxu0 0
    %921 = vmatpush1.bf16.msra.mxu0 0
    %922 = vmatprep.subr.bf16.mxu0 0
    %923 = vmatpush1.bf16.msra.mxu0 0
    %924 = vmatprep.mubr.bf16.mxu0 %v678
    %925 = vmatmul.mubr.bf16.gmra.mrb[0].mxu0 %v339
    %v926 = vpop.f32.mrb[0].mxu0
    %v927 = vadd.f32 %v428, %v926
    %v928 = vpop.f32.mrb[0].mxu0
    %v929 = vadd.f32 %v432, %v928
    %v930 = vpop.f32.mrb[0].mxu0
    %v931 = vadd.f32 %v428, %v930
    %v932 = vpop.f32.mrb[0].mxu0
    %v933 = vadd.f32 %v432, %v932
    %934 = vmatprep.mubr.bf16.mxu0 %v681
    %935 = vmatmul.mubr.bf16.gmra.mrb[0].mxu0 %v341
    %v936 = vpop.f32.mrb[0].mxu0
    %v937 = vadd.f32 %v428, %v936
    %v938 = vpop.f32.mrb[0].mxu0
    %v939 = vadd.f32 %v432, %v938
    %v940 = vpop.f32.mrb[0].mxu0
    %v941 = vadd.f32 %v428, %v940
    %v942 = vpop.f32.mrb[0].mxu0
    %v943 = vadd.f32 %v432, %v942
    %944 = vmatprep.mubr.bf16.mxu0 %v684
    %945 = vmatmul.mubr.bf16.gmra.mrb[0].mxu0 %v343
    %v946 = vpop.f32.mrb[0].mxu0
    %v947 = vadd.f32 %v428, %v946
    %v948 = vpop.f32.mrb[0].mxu0
    %v949 = vadd.f32 %v432, %v948
    %v950 = vpop.f32.mrb[0].mxu0
    %v951 = vadd.f32 %v428, %v950
    %v952 = vpop.f32.mrb[0].mxu0
    %v953 = vadd.f32 %v432, %v952
    %954 = vmatprep.mubr.bf16.mxu0 %v687
    %955 = vmatmul.mubr.bf16.gmra.mrb[0].mxu0 %v345
    %v956 = vpop.f32.mrb[0].mxu0
    %v957 = vadd.f32 %v428, %v956
    %v958 = vpop.f32.mrb[0].mxu0
    %v959 = vadd.f32 %v432, %v958
    %v960 = vpop.f32.mrb[0].mxu0
    %v961 = vadd.f32 %v428, %v960
    %v962 = vpop.f32.mrb[0].mxu0
    %v963 = vadd.f32 %v432, %v962
    %964 = vmatprep.mubr.bf16.mxu0 %v690
    %965 = vmatmul.mubr.bf16.gmra.mrb[0].mxu0 %v347
    %v966 = vpop.f32.mrb[0].mxu0
    %v967 = vadd.f32 %v428, %v966
    %v968 = vpop.f32.mrb[0].mxu0
    %v969 = vadd.f32 %v432, %v968
    %v970 = vpop.f32.mrb[0].mxu0
    %v971 = vadd.f32 %v428, %v970
    %v972 = vpop.f32.mrb[0].mxu0
    %v973 = vadd.f32 %v432, %v972
    %974 = vmatprep.mubr.bf16.mxu0 %v693
    %975 = vmatmul.mubr.bf16.gmra.mrb[0].mxu0 %v349
    %v976 = vpop.f32.mrb[0].mxu0
    %v977 = vadd.f32 %v428, %v976
    %v978 = vpop.f32.mrb[0].mxu0
    %v979 = vadd.f32 %v432, %v978
    %v980 = vpop.f32.mrb[0].mxu0
    %v981 = vadd.f32 %v428, %v980
    %v982 = vpop.f32.mrb[0].mxu0
    %v983 = vadd.f32 %v432, %v982
    %984 = vmatprep.mubr.bf16.mxu0 %v696
    %985 = vmatmul.mubr.bf16.gmra.mrb[0].mxu0 %v351
    %v986 = vpop.f32.mrb[0].mxu0
    %v987 = vadd.f32 %v428, %v986
    %v988 = vpop.f32.mrb[0].mxu0
    %v989 = vadd.f32 %v432, %v988
    %v990 = vpop.f32.mrb[0].mxu0
    %v991 = vadd.f32 %v428, %v990
    %v992 = vpop.f32.mrb[0].mxu0
    %v993 = vadd.f32 %v432, %v992
    %994 = vmatprep.mubr.bf16.mxu0 %v699
    %995 = vmatmul.mubr.bf16.gmra.mrb[0].mxu0 %v353
    %v996 = vpop.f32.mrb[0].mxu0
    %v997 = vadd.f32 %v428, %v996
    %v998 = vpop.f32.mrb[0].mxu0
    %v999 = vadd.f32 %v432, %v998
    %v1000 = vpop.f32.mrb[0].mxu0
    %v1001 = vadd.f32 %v428, %v1000
    %v1002 = vpop.f32.mrb[0].mxu0
    %v1003 = vadd.f32 %v432, %v1002
    %1004 = vmatprep.mubr.bf16.mxu0 %v702
    %1005 = vmatmul.mubr.bf16.gmra.mrb[0].mxu0 %v355
    %v1006 = vpop.f32.mrb[0].mxu0
    %v1007 = vadd.f32 %v428, %v1006
    %v1008 = vpop.f32.mrb[0].mxu0
    %v1009 = vadd.f32 %v432, %v1008
    %v1010 = vpop.f32.mrb[0].mxu0
    %v1011 = vadd.f32 %v428, %v1010
    %v1012 = vpop.f32.mrb[0].mxu0
    %v1013 = vadd.f32 %v432, %v1012
    %1014 = vmatprep.mubr.bf16.mxu0 %v705
    %1015 = vmatmul.mubr.bf16.gmra.mrb[0].mxu0 %v357
    %v1016 = vpop.f32.mrb[0].mxu0
    %v1017 = vadd.f32 %v428, %v1016
    %v1018 = vpop.f32.mrb[0].mxu0
    %v1019 = vadd.f32 %v432, %v1018
    %v1020 = vpop.f32.mrb[0].mxu0
    %v1021 = vadd.f32 %v428, %v1020
    %v1022 = vpop.f32.mrb[0].mxu0
    %v1023 = vadd.f32 %v432, %v1022
    %1024 = vmatprep.mubr.bf16.mxu0 %v708
    %1025 = vmatmul.mubr.bf16.gmra.mrb[0].mxu0 %v359
    %v1026 = vpop.f32.mrb[0].mxu0
    %v1027 = vadd.f32 %v428, %v1026
    %v1028 = vpop.f32.mrb[0].mxu0
    %v1029 = vadd.f32 %v432, %v1028
    %v1030 = vpop.f32.mrb[0].mxu0
    %v1031 = vadd.f32 %v428, %v1030
    %v1032 = vpop.f32.mrb[0].mxu0
    %v1033 = vadd.f32 %v432, %v1032
    %1034 = vmatprep.mubr.bf16.mxu0 %v711
    %1035 = vmatmul.mubr.bf16.gmra.mrb[0].mxu0 %v361
    %v1036 = vpop.f32.mrb[0].mxu0
    %v1037 = vadd.f32 %v428, %v1036
    %v1038 = vpop.f32.mrb[0].mxu0
    %v1039 = vadd.f32 %v432, %v1038
    %v1040 = vpop.f32.mrb[0].mxu0
    %v1041 = vadd.f32 %v428, %v1040
    %v1042 = vpop.f32.mrb[0].mxu0
    %v1043 = vadd.f32 %v432, %v1042
    %1044 = vmatprep.mubr.bf16.mxu0 %v714
    %1045 = vmatmul.mubr.bf16.gmra.mrb[0].mxu0 %v363
    %v1046 = vpop.f32.mrb[0].mxu0
    %v1047 = vadd.f32 %v428, %v1046
    %v1048 = vpop.f32.mrb[0].mxu0
    %v1049 = vadd.f32 %v432, %v1048
    %v1050 = vpop.f32.mrb[0].mxu0
    %v1051 = vadd.f32 %v428, %v1050
    %v1052 = vpop.f32.mrb[0].mxu0
    %v1053 = vadd.f32 %v432, %v1052
    %1054 = vmatprep.mubr.bf16.mxu0 %v717
    %1055 = vmatmul.mubr.bf16.gmra.mrb[0].mxu0 %v365
    %v1056 = vpop.f32.mrb[0].mxu0
    %v1057 = vadd.f32 %v428, %v1056
    %v1058 = vpop.f32.mrb[0].mxu0
    %v1059 = vadd.f32 %v432, %v1058
    %v1060 = vpop.f32.mrb[0].mxu0
    %v1061 = vadd.f32 %v428, %v1060
    %v1062 = vpop.f32.mrb[0].mxu0
    %v1063 = vadd.f32 %v432, %v1062
    %1064 = vdwg.mxu0
    %v1065 = vmax.f32 %v754, %v756
    %v1066 = vmax.f32 %v758, %v760
    %v1067 = vmax.f32 %v764, %v766
    %v1068 = vmax.f32 %v768, %v770
    %v1069 = vmax.f32 %v774, %v776
    %v1070 = vmax.f32 %v778, %v780
    %v1071 = vmax.f32 %v784, %v786
    %v1072 = vmax.f32 %v788, %v790
    %v1073 = vmax.f32 %v794, %v796
    %v1074 = vmax.f32 %v798, %v800
    %v1075 = vmax.f32 %v804, %v806
    %v1076 = vmax.f32 %v808, %v810
    %v1077 = vmax.f32 %v814, %v816
    %v1078 = vmax.f32 %v818, %v820
    %v1079 = vmax.f32 %v824, %v826
    %v1080 = vmax.f32 %v828, %v830
    %v1081 = vmax.f32 %v834, %v836
    %v1082 = vmax.f32 %v838, %v840
    %v1083 = vmax.f32 %v844, %v846
    %v1084 = vmax.f32 %v848, %v850
    %v1085 = vmax.f32 %v854, %v856
    %v1086 = vmax.f32 %v858, %v860
    %v1087 = vmax.f32 %v864, %v866
    %v1088 = vmax.f32 %v868, %v870
    %v1089 = vmax.f32 %v874, %v876
    %v1090 = vmax.f32 %v878, %v880
    %v1091 = vmax.f32 %v884, %v886
    %v1092 = vmax.f32 %v888, %v890
    %v1093 = vmax.f32 %v927, %v929
    %v1094 = vmax.f32 %v931, %v933
    %v1095 = vmax.f32 %v937, %v939
    %v1096 = vmax.f32 %v941, %v943
    %v1097 = vmax.f32 %v947, %v949
    %v1098 = vmax.f32 %v951, %v953
    %v1099 = vmax.f32 %v957, %v959
    %v1100 = vmax.f32 %v961, %v963
    %v1101 = vmax.f32 %v967, %v969
    %v1102 = vmax.f32 %v971, %v973
    %v1103 = vmax.f32 %v977, %v979
    %v1104 = vmax.f32 %v981, %v983
    %v1105 = vmax.f32 %v987, %v989
    %v1106 = vmax.f32 %v991, %v993
    %v1107 = vmax.f32 %v997, %v999
    %v1108 = vmax.f32 %v1001, %v1003
    %v1109 = vmax.f32 %v1007, %v1009
    %v1110 = vmax.f32 %v1011, %v1013
    %v1111 = vmax.f32 %v1017, %v1019
    %v1112 = vmax.f32 %v1021, %v1023
    %v1113 = vmax.f32 %v1027, %v1029
    %v1114 = vmax.f32 %v1031, %v1033
    %v1115 = vmax.f32 %v1037, %v1039
    %v1116 = vmax.f32 %v1041, %v1043
    %v1117 = vmax.f32 %v1047, %v1049
    %v1118 = vmax.f32 %v1051, %v1053
    %v1119 = vmax.f32 %v1057, %v1059
    %v1120 = vmax.f32 %v1061, %v1063
    %v1121 = vmax.f32 %v1065, %v1093
    %v1122 = vmax.f32 %v1066, %v1094
    %v1123 = vmax.f32 %v1067, %v1095
    %v1124 = vmax.f32 %v1068, %v1096
    %v1125 = vmax.f32 %v1069, %v1097
    %v1126 = vmax.f32 %v1070, %v1098
    %v1127 = vmax.f32 %v1071, %v1099
    %v1128 = vmax.f32 %v1072, %v1100
    %v1129 = vmax.f32 %v1073, %v1101
    %v1130 = vmax.f32 %v1074, %v1102
    %v1131 = vmax.f32 %v1075, %v1103
    %v1132 = vmax.f32 %v1076, %v1104
    %v1133 = vmax.f32 %v1077, %v1105
    %v1134 = vmax.f32 %v1078, %v1106
    %v1135 = vmax.f32 %v1079, %v1107
    %v1136 = vmax.f32 %v1080, %v1108
    %v1137 = vmax.f32 %v1081, %v1109
    %v1138 = vmax.f32 %v1082, %v1110
    %v1139 = vmax.f32 %v1083, %v1111
    %v1140 = vmax.f32 %v1084, %v1112
    %v1141 = vmax.f32 %v1085, %v1113
    %v1142 = vmax.f32 %v1086, %v1114
    %v1143 = vmax.f32 %v1087, %v1115
    %v1144 = vmax.f32 %v1088, %v1116
    %v1145 = vmax.f32 %v1089, %v1117
    %v1146 = vmax.f32 %v1090, %v1118
    %v1147 = vmax.f32 %v1091, %v1119
    %v1148 = vmax.f32 %v1092, %v1120
    %v1149 = vmax.f32 %v1121, 0.0
    %v1150 = vmax.f32 %v1122, 0.0
    %v1151 = vmax.f32 %v1123, 0.0
    %v1152 = vmax.f32 %v1124, 0.0
    %v1153 = vmax.f32 %v1125, 0.0
    %v1154 = vmax.f32 %v1126, 0.0
    %v1155 = vmax.f32 %v1127, 0.0
    %v1156 = vmax.f32 %v1128, 0.0
    %v1157 = vmax.f32 %v1129, 0.0
    %v1158 = vmax.f32 %v1130, 0.0
    %v1159 = vmax.f32 %v1131, 0.0
    %v1160 = vmax.f32 %v1132, 0.0
    %v1161 = vmax.f32 %v1133, 0.0
    %v1162 = vmax.f32 %v1134, 0.0
    %v1163 = vmax.f32 %v1135, 0.0
    %v1164 = vmax.f32 %v1136, 0.0
    %v1165 = vmax.f32 %v1137, 0.0
    %v1166 = vmax.f32 %v1138, 0.0
    %v1167 = vmax.f32 %v1139, 0.0
    %v1168 = vmax.f32 %v1140, 0.0
    %v1169 = vmax.f32 %v1141, 0.0
    %v1170 = vmax.f32 %v1142, 0.0
    %v1171 = vmax.f32 %v1143, 0.0
    %v1172 = vmax.f32 %v1144, 0.0
    %v1173 = vmax.f32 %v1145, 0.0
    %v1174 = vmax.f32 %v1146, 0.0
    %v1175 = vmax.f32 %v1147, 0.0
    %v1176 = vmax.f32 %v1148, 0.0
    %v1177 = vrot.slane %v1149, 1
    %v1178 = vrot.slane %v1150, 1
    %v1179 = vrot.slane %v1151, 1
    %v1180 = vrot.slane %v1152, 1
    %v1181 = vrot.slane %v1153, 1
    %v1182 = vrot.slane %v1154, 1
    %v1183 = vrot.slane %v1155, 1
    %v1184 = vrot.slane %v1156, 1
    %v1185 = vrot.slane %v1157, 1
    %v1186 = vrot.slane %v1158, 1
    %v1187 = vrot.slane %v1159, 1
    %v1188 = vrot.slane %v1160, 1
    %v1189 = vrot.slane %v1161, 1
    %v1190 = vrot.slane %v1162, 1
    %v1191 = vrot.slane %v1163, 1
    %v1192 = vrot.slane %v1164, 1
    %v1193 = vrot.slane %v1165, 1
    %v1194 = vrot.slane %v1166, 1
    %v1195 = vrot.slane %v1167, 1
    %v1196 = vrot.slane %v1168, 1
    %v1197 = vrot.slane %v1169, 1
    %v1198 = vrot.slane %v1170, 1
    %v1199 = vrot.slane %v1171, 1
    %v1200 = vrot.slane %v1172, 1
    %v1201 = vrot.slane %v1173, 1
    %v1202 = vrot.slane %v1174, 1
    %v1203 = vrot.slane %v1175, 1
    %v1204 = vrot.slane %v1176, 1
    %v1205 = vsel %vm112, %v1203, %v1204
    %v1206 = vsel %vm112, %v1202, %v1203
    %v1207 = vsel %vm112, %v1201, %v1202
    %v1208 = vsel %vm112, %v1200, %v1201
    %v1209 = vsel %vm112, %v1199, %v1200
    %v1210 = vsel %vm112, %v1198, %v1199
    %v1211 = vsel %vm112, %v1197, %v1198
    %v1212 = vsel %vm112, %v1196, %v1197
    %v1213 = vsel %vm112, %v1195, %v1196
    %v1214 = vsel %vm112, %v1194, %v1195
    %v1215 = vsel %vm112, %v1193, %v1194
    %v1216 = vsel %vm112, %v1192, %v1193
    %v1217 = vsel %vm112, %v1191, %v1192
    %v1218 = vsel %vm112, %v1190, %v1191
    %v1219 = vsel %vm112, %v1189, %v1190
    %v1220 = vsel %vm112, %v1188, %v1189
    %v1221 = vsel %vm112, %v1187, %v1188
    %v1222 = vsel %vm112, %v1186, %v1187
    %v1223 = vsel %vm112, %v1185, %v1186
    %v1224 = vsel %vm112, %v1184, %v1185
    %v1225 = vsel %vm112, %v1183, %v1184
    %v1226 = vsel %vm112, %v1182, %v1183
    %v1227 = vsel %vm112, %v1181, %v1182
    %v1228 = vsel %vm112, %v1180, %v1181
    %v1229 = vsel %vm112, %v1179, %v1180
    %v1230 = vsel %vm112, %v1178, %v1179
    %v1231 = vsel %vm112, %v1177, %v1178
    %v1232 = vsel %vm112, %v1204, %v1177
    %v1233 = vrot.slane %v1149, 2
    %v1234 = vrot.slane %v1150, 2
    %v1235 = vrot.slane %v1151, 2
    %v1236 = vrot.slane %v1152, 2
    %v1237 = vrot.slane %v1153, 2
    %v1238 = vrot.slane %v1154, 2
    %v1239 = vrot.slane %v1155, 2
    %v1240 = vrot.slane %v1156, 2
    %v1241 = vrot.slane %v1157, 2
    %v1242 = vrot.slane %v1158, 2
    %v1243 = vrot.slane %v1159, 2
    %v1244 = vrot.slane %v1160, 2
    %v1245 = vrot.slane %v1161, 2
    %v1246 = vrot.slane %v1162, 2
    %v1247 = vrot.slane %v1163, 2
    %v1248 = vrot.slane %v1164, 2
    %v1249 = vrot.slane %v1165, 2
    %v1250 = vrot.slane %v1166, 2
    %v1251 = vrot.slane %v1167, 2
    %v1252 = vrot.slane %v1168, 2
    %v1253 = vrot.slane %v1169, 2
    %v1254 = vrot.slane %v1170, 2
    %v1255 = vrot.slane %v1171, 2
    %v1256 = vrot.slane %v1172, 2
    %v1257 = vrot.slane %v1173, 2
    %v1258 = vrot.slane %v1174, 2
    %v1259 = vrot.slane %v1175, 2
    %v1260 = vrot.slane %v1176, 2
    %v1261 = vsel %vm169, %v1259, %v1260
    %v1262 = vsel %vm169, %v1258, %v1259
    %v1263 = vsel %vm169, %v1257, %v1258
    %v1264 = vsel %vm169, %v1256, %v1257
    %v1265 = vsel %vm169, %v1255, %v1256
    %v1266 = vsel %vm169, %v1254, %v1255
    %v1267 = vsel %vm169, %v1253, %v1254
    %v1268 = vsel %vm169, %v1252, %v1253
    %v1269 = vsel %vm169, %v1251, %v1252
    %v1270 = vsel %vm169, %v1250, %v1251
    %v1271 = vsel %vm169, %v1249, %v1250
    %v1272 = vsel %vm169, %v1248, %v1249
    %v1273 = vsel %vm169, %v1247, %v1248
    %v1274 = vsel %vm169, %v1246, %v1247
    %v1275 = vsel %vm169, %v1245, %v1246
    %v1276 = vsel %vm169, %v1244, %v1245
    %v1277 = vsel %vm169, %v1243, %v1244
    %v1278 = vsel %vm169, %v1242, %v1243
    %v1279 = vsel %vm169, %v1241, %v1242
    %v1280 = vsel %vm169, %v1240, %v1241
    %v1281 = vsel %vm169, %v1239, %v1240
    %v1282 = vsel %vm169, %v1238, %v1239
    %v1283 = vsel %vm169, %v1237, %v1238
    %v1284 = vsel %vm169, %v1236, %v1237
    %v1285 = vsel %vm169, %v1235, %v1236
    %v1286 = vsel %vm169, %v1234, %v1235
    %v1287 = vsel %vm169, %v1233, %v1234
    %v1288 = vsel %vm169, %v1260, %v1233
    %v1289 = vrot.slane %v1149, 3
    %v1290 = vrot.slane %v1150, 3
    %v1291 = vrot.slane %v1151, 3
    %v1292 = vrot.slane %v1152, 3
    %v1293 = vrot.slane %v1153, 3
    %v1294 = vrot.slane %v1154, 3
    %v1295 = vrot.slane %v1155, 3
    %v1296 = vrot.slane %v1156, 3
    %v1297 = vrot.slane %v1157, 3
    %v1298 = vrot.slane %v1158, 3
    %v1299 = vrot.slane %v1159, 3
    %v1300 = vrot.slane %v1160, 3
    %v1301 = vrot.slane %v1161, 3
    %v1302 = vrot.slane %v1162, 3
    %v1303 = vrot.slane %v1163, 3
    %v1304 = vrot.slane %v1164, 3
    %v1305 = vrot.slane %v1165, 3
    %v1306 = vrot.slane %v1166, 3
    %v1307 = vrot.slane %v1167, 3
    %v1308 = vrot.slane %v1168, 3
    %v1309 = vrot.slane %v1169, 3
    %v1310 = vrot.slane %v1170, 3
    %v1311 = vrot.slane %v1171, 3
    %v1312 = vrot.slane %v1172, 3
    %v1313 = vrot.slane %v1173, 3
    %v1314 = vrot.slane %v1174, 3
    %v1315 = vrot.slane %v1175, 3
    %v1316 = vrot.slane %v1176, 3
    %vm1317 = vcmp.lt.s32.totalorder %v111, 5
    %v1318 = vsel %vm1317, %v1315, %v1316
    %v1319 = vsel %vm1317, %v1314, %v1315
    %v1320 = vsel %vm1317, %v1313, %v1314
    %v1321 = vsel %vm1317, %v1312, %v1313
    %v1322 = vsel %vm1317, %v1311, %v1312
    %v1323 = vsel %vm1317, %v1310, %v1311
    %v1324 = vsel %vm1317, %v1309, %v1310
    %v1325 = vsel %vm1317, %v1308, %v1309
    %v1326 = vsel %vm1317, %v1307, %v1308
    %v1327 = vsel %vm1317, %v1306, %v1307
    %v1328 = vsel %vm1317, %v1305, %v1306
    %v1329 = vsel %vm1317, %v1304, %v1305
    %v1330 = vsel %vm1317, %v1303, %v1304
    %v1331 = vsel %vm1317, %v1302, %v1303
    %v1332 = vsel %vm1317, %v1301, %v1302
    %v1333 = vsel %vm1317, %v1300, %v1301
    %v1334 = vsel %vm1317, %v1299, %v1300
    %v1335 = vsel %vm1317, %v1298, %v1299
    %v1336 = vsel %vm1317, %v1297, %v1298
    %v1337 = vsel %vm1317, %v1296, %v1297
    %v1338 = vsel %vm1317, %v1295, %v1296
    %v1339 = vsel %vm1317, %v1294, %v1295
    %v1340 = vsel %vm1317, %v1293, %v1294
    %v1341 = vsel %vm1317, %v1292, %v1293
    %v1342 = vsel %vm1317, %v1291, %v1292
    %v1343 = vsel %vm1317, %v1290, %v1291
    %v1344 = vsel %vm1317, %v1289, %v1290
    %v1345 = vsel %vm1317, %v1316, %v1289
    %v1346 = vrot.slane %v1149, 4
    %v1347 = vrot.slane %v1150, 4
    %v1348 = vrot.slane %v1151, 4
    %v1349 = vrot.slane %v1152, 4
    %v1350 = vrot.slane %v1153, 4
    %v1351 = vrot.slane %v1154, 4
    %v1352 = vrot.slane %v1155, 4
    %v1353 = vrot.slane %v1156, 4
    %v1354 = vrot.slane %v1157, 4
    %v1355 = vrot.slane %v1158, 4
    %v1356 = vrot.slane %v1159, 4
    %v1357 = vrot.slane %v1160, 4
    %v1358 = vrot.slane %v1161, 4
    %v1359 = vrot.slane %v1162, 4
    %v1360 = vrot.slane %v1163, 4
    %v1361 = vrot.slane %v1164, 4
    %v1362 = vrot.slane %v1165, 4
    %v1363 = vrot.slane %v1166, 4
    %v1364 = vrot.slane %v1167, 4
    %v1365 = vrot.slane %v1168, 4
    %v1366 = vrot.slane %v1169, 4
    %v1367 = vrot.slane %v1170, 4
    %v1368 = vrot.slane %v1171, 4
    %v1369 = vrot.slane %v1172, 4
    %v1370 = vrot.slane %v1173, 4
    %v1371 = vrot.slane %v1174, 4
    %v1372 = vrot.slane %v1175, 4
    %v1373 = vrot.slane %v1176, 4
    %vm1374 = vcmp.lt.s32.totalorder %v111, 4
    %v1375 = vsel %vm1374, %v1372, %v1373
    %v1376 = vsel %vm1374, %v1371, %v1372
    %v1377 = vsel %vm1374, %v1370, %v1371
    %v1378 = vsel %vm1374, %v1369, %v1370
    %v1379 = vsel %vm1374, %v1368, %v1369
    %v1380 = vsel %vm1374, %v1367, %v1368
    %v1381 = vsel %vm1374, %v1366, %v1367
    %v1382 = vsel %vm1374, %v1365, %v1366
    %v1383 = vsel %vm1374, %v1364, %v1365
    %v1384 = vsel %vm1374, %v1363, %v1364
    %v1385 = vsel %vm1374, %v1362, %v1363
    %v1386 = vsel %vm1374, %v1361, %v1362
    %v1387 = vsel %vm1374, %v1360, %v1361
    %v1388 = vsel %vm1374, %v1359, %v1360
    %v1389 = vsel %vm1374, %v1358, %v1359
    %v1390 = vsel %vm1374, %v1357, %v1358
    %v1391 = vsel %vm1374, %v1356, %v1357
    %v1392 = vsel %vm1374, %v1355, %v1356
    %v1393 = vsel %vm1374, %v1354, %v1355
    %v1394 = vsel %vm1374, %v1353, %v1354
    %v1395 = vsel %vm1374, %v1352, %v1353
    %v1396 = vsel %vm1374, %v1351, %v1352
    %v1397 = vsel %vm1374, %v1350, %v1351
    %v1398 = vsel %vm1374, %v1349, %v1350
    %v1399 = vsel %vm1374, %v1348, %v1349
    %v1400 = vsel %vm1374, %v1347, %v1348
    %v1401 = vsel %vm1374, %v1346, %v1347
    %v1402 = vsel %vm1374, %v1373, %v1346
    %v1403 = vpack.c.bf16 %v1150, %v1149
    %v1404 = vpack.c.bf16 %v1230, %v1231
    %v1405 = vpack.c.bf16 %v1286, %v1287
    %v1406 = vpack.c.bf16 %v1343, %v1344
    %v1407 = vpack.c.bf16 %v1400, %v1401
    %v1408 = vpack.c.bf16 %v1152, %v1151
    %v1409 = vpack.c.bf16 %v1228, %v1229
    %v1410 = vpack.c.bf16 %v1284, %v1285
    %v1411 = vpack.c.bf16 %v1341, %v1342
    %v1412 = vpack.c.bf16 %v1398, %v1399
    %v1413 = vpack.c.bf16 %v1154, %v1153
    %v1414 = vpack.c.bf16 %v1226, %v1227
    %v1415 = vpack.c.bf16 %v1282, %v1283
    %v1416 = vpack.c.bf16 %v1339, %v1340
    %v1417 = vpack.c.bf16 %v1396, %v1397
    %v1418 = vpack.c.bf16 %v1156, %v1155
    %v1419 = vpack.c.bf16 %v1224, %v1225
    %v1420 = vpack.c.bf16 %v1280, %v1281
    %v1421 = vpack.c.bf16 %v1337, %v1338
    %v1422 = vpack.c.bf16 %v1394, %v1395
    %v1423 = vpack.c.bf16 %v1158, %v1157
    %v1424 = vpack.c.bf16 %v1222, %v1223
    %v1425 = vpack.c.bf16 %v1278, %v1279
    %v1426 = vpack.c.bf16 %v1335, %v1336
    %v1427 = vpack.c.bf16 %v1392, %v1393
    %v1428 = vpack.c.bf16 %v1160, %v1159
    %v1429 = vpack.c.bf16 %v1220, %v1221
    %v1430 = vpack.c.bf16 %v1276, %v1277
    %v1431 = vpack.c.bf16 %v1333, %v1334
    %v1432 = vpack.c.bf16 %v1390, %v1391
    %v1433 = vpack.c.bf16 %v1162, %v1161
    %v1434 = vpack.c.bf16 %v1218, %v1219
    %v1435 = vpack.c.bf16 %v1274, %v1275
    %v1436 = vpack.c.bf16 %v1331, %v1332
    %v1437 = vpack.c.bf16 %v1388, %v1389
    %v1438 = vpack.c.bf16 %v1164, %v1163
    %v1439 = vpack.c.bf16 %v1216, %v1217
    %v1440 = vpack.c.bf16 %v1272, %v1273
    %v1441 = vpack.c.bf16 %v1329, %v1330
    %v1442 = vpack.c.bf16 %v1386, %v1387
    %v1443 = vpack.c.bf16 %v1166, %v1165
    %v1444 = vpack.c.bf16 %v1214, %v1215
    %v1445 = vpack.c.bf16 %v1270, %v1271
    %v1446 = vpack.c.bf16 %v1327, %v1328
    %v1447 = vpack.c.bf16 %v1384, %v1385
    %v1448 = vpack.c.bf16 %v1168, %v1167
    %v1449 = vpack.c.bf16 %v1212, %v1213
    %v1450 = vpack.c.bf16 %v1268, %v1269
    %v1451 = vpack.c.bf16 %v1325, %v1326
    %v1452 = vpack.c.bf16 %v1382, %v1383
    %v1453 = vpack.c.bf16 %v1170, %v1169
    %v1454 = vpack.c.bf16 %v1210, %v1211
    %v1455 = vpack.c.bf16 %v1266, %v1267
    %v1456 = vpack.c.bf16 %v1323, %v1324
    %v1457 = vpack.c.bf16 %v1380, %v1381
    %v1458 = vpack.c.bf16 %v1172, %v1171
    %v1459 = vpack.c.bf16 %v1208, %v1209
    %v1460 = vpack.c.bf16 %v1264, %v1265
    %v1461 = vpack.c.bf16 %v1321, %v1322
    %v1462 = vpack.c.bf16 %v1378, %v1379
    %v1463 = vpack.c.bf16 %v1174, %v1173
    %v1464 = vpack.c.bf16 %v1206, %v1207
    %v1465 = vpack.c.bf16 %v1262, %v1263
    %v1466 = vpack.c.bf16 %v1319, %v1320
    %v1467 = vpack.c.bf16 %v1376, %v1377
    %v1468 = vpack.c.bf16 %v1176, %v1175
    %v1469 = vpack.c.bf16 %v1232, %v1205
    %v1470 = vpack.c.bf16 %v1288, %v1261
    %v1471 = vpack.c.bf16 %v1345, %v1318
    %v1472 = vpack.c.bf16 %v1402, %v1375
    %v1473 = vld [vmem:[%s3] sm:$0xff]
    %v1474 = vld [vmem:[%s3 + $0x8] sm:$0xff]
    %v1475 = vld [vmem:[%s3 + $0x10] sm:$0xff]
    %v1476 = vld [vmem:[%s3 + $0x18] sm:$0xff]
    %v1477 = vld [vmem:[%s3 + $0x20] sm:$0xff]
    %v1478 = vld [vmem:[%s3 + $0x28] sm:$0xff]
    %v1479 = vld [vmem:[%s3 + $0x30] sm:$0xff]
    %v1480 = vld [vmem:[%s3 + $0x38] sm:$0xff]
    %v1481 = vld [vmem:[%s3 + $0x40] sm:$0xff]
    %v1482 = vld [vmem:[%s3 + $0x48] sm:$0xff]
    %v1483 = vld [vmem:[%s3 + $0x50] sm:$0xff]
    %v1484 = vld [vmem:[%s3 + $0x58] sm:$0xff]
    %v1485 = vld [vmem:[%s3 + $0x60] sm:$0xff]
    %v1486 = vld [vmem:[%s3 + $0x68] sm:$0xff]
    %v1487 = vld [vmem:[%s3 + $0x70] sm:$0xff]
    %v1488 = vld [vmem:[%s3 + $0x78] sm:$0xff]
    %v1489 = vld [vmem:[%s3 + $0x80] sm:$0xff]
    %v1490 = vld [vmem:[%s3 + $0x88] sm:$0xff]
    %v1491 = vld [vmem:[%s3 + $0x90] sm:$0xff]
    %v1492 = vld [vmem:[%s3 + $0x98] sm:$0xff]
    %v1493 = vld [vmem:[%s3 + $0xa0] sm:$0xff]
    %v1494 = vld [vmem:[%s3 + $0xa8] sm:$0xff]
    %v1495 = vld [vmem:[%s3 + $0xb0] sm:$0xff]
    %v1496 = vld [vmem:[%s3 + $0xb8] sm:$0xff]
    %v1497 = vld [vmem:[%s3 + $0xc0] sm:$0xff]
    %v1498 = vld [vmem:[%s3 + $0xc8] sm:$0xff]
    %v1499 = vld [vmem:[%s3 + $0xd0] sm:$0xff]
    %v1500 = vld [vmem:[%s3 + $0xd8] sm:$0xff]
    %v1501 = vld [vmem:[%s3 + $0xe0] sm:$0xff]
    %v1502 = vld [vmem:[%s3 + $0xe8] sm:$0xff]
    %v1503 = vld [vmem:[%s3 + $0xf0] sm:$0xff]
    %v1504 = vld [vmem:[%s3 + $0xf8] sm:$0xff]
    %v1505 = vld [vmem:[%s3 + $0x100] sm:$0xff]
    %v1506 = vld [vmem:[%s3 + $0x108] sm:$0xff]
    %v1507 = vld [vmem:[%s3 + $0x110] sm:$0xff]
    %v1508 = vld [vmem:[%s3 + $0x118] sm:$0xff]
    %v1509 = vld [vmem:[%s3 + $0x120] sm:$0xff]
    %v1510 = vld [vmem:[%s3 + $0x128] sm:$0xff]
    %v1511 = vld [vmem:[%s3 + $0x130] sm:$0xff]
    %v1512 = vld [vmem:[%s3 + $0x138] sm:$0xff]
    %v1513 = vld [vmem:[%s3 + $0x140] sm:$0xff]
    %v1514 = vld [vmem:[%s3 + $0x148] sm:$0xff]
    %v1515 = vld [vmem:[%s3 + $0x150] sm:$0xff]
    %v1516 = vld [vmem:[%s3 + $0x158] sm:$0xff]
    %v1517 = vld [vmem:[%s3 + $0x160] sm:$0xff]
    %v1518 = vld [vmem:[%s3 + $0x168] sm:$0xff]
    %v1519 = vld [vmem:[%s3 + $0x170] sm:$0xff]
    %v1520 = vld [vmem:[%s3 + $0x178] sm:$0xff]
    %v1521 = vld [vmem:[%s3 + $0x180] sm:$0xff]
    %v1522 = vld [vmem:[%s3 + $0x188] sm:$0xff]
    %v1523 = vld [vmem:[%s3 + $0x190] sm:$0xff]
    %v1524 = vld [vmem:[%s3 + $0x198] sm:$0xff]
    %v1525 = vld [vmem:[%s3 + $0x1a0] sm:$0xff]
    %v1526 = vld [vmem:[%s3 + $0x1a8] sm:$0xff]
    %v1527 = vld [vmem:[%s3 + $0x1b0] sm:$0xff]
    %v1528 = vld [vmem:[%s3 + $0x1b8] sm:$0xff]
    %v1529 = vld [vmem:[%s3 + $0x1c0] sm:$0xff]
    %v1530 = vld [vmem:[%s3 + $0x1c8] sm:$0xff]
    %v1531 = vld [vmem:[%s3 + $0x1d0] sm:$0xff]
    %v1532 = vld [vmem:[%s3 + $0x1d8] sm:$0xff]
    %v1533 = vld [vmem:[%s3 + $0x1e0] sm:$0xff]
    %v1534 = vld [vmem:[%s3 + $0x1e8] sm:$0xff]
    %v1535 = vld [vmem:[%s3 + $0x1f0] sm:$0xff]
    %v1536 = vld [vmem:[%s3 + $0x1f8] sm:$0xff]
    %v1537 = vld [vmem:[%s3 + $0x200] sm:$0xff]
    %v1538 = vld [vmem:[%s3 + $0x208] sm:$0xff]
    %v1539 = vld [vmem:[%s3 + $0x210] sm:$0xff]
    %v1540 = vld [vmem:[%s3 + $0x218] sm:$0xff]
    %v1541 = vld [vmem:[%s3 + $0x220] sm:$0xff]
    %v1542 = vld [vmem:[%s3 + $0x228] sm:$0xff]
    %v1543 = vld [vmem:[%s3 + $0x230] sm:$0xff]
    %v1544 = vld [vmem:[%s3 + $0x238] sm:$0xff]
    %v1545 = vld [vmem:[%s3 + $0x240] sm:$0xff]
    %v1546 = vld [vmem:[%s3 + $0x248] sm:$0xff]
    %v1547 = vld [vmem:[%s3 + $0x250] sm:$0xff]
    %v1548 = vld [vmem:[%s3 + $0x258] sm:$0xff]
    %v1549 = vld [vmem:[%s3 + $0x260] sm:$0xff]
    %v1550 = vld [vmem:[%s3 + $0x268] sm:$0xff]
    %v1551 = vld [vmem:[%s3 + $0x270] sm:$0xff]
    %v1552 = vld [vmem:[%s3 + $0x278] sm:$0xff]
    %v1553 = vld [vmem:[%s4] sm:$0x3]
    %v1555 = vlaneseq
    %v1556 = vshrl.u32 %v1555, 7
    %v1557 = vsub.s32 0, %v1556
    %v1558 = vrot.slane %v1553, %v1557
    %v1559 = vlaneseq
    %v1560 = vshrl.u32 %v1559, 7
    %v1561 = vsub.s32 1, %v1560
    %v1562 = vrot.slane %v1553, %v1561
    %v1645 = vunpack.c.l.b16 %v1473
    %v1646 = vunpack.c.h.b16 %v1473
    %v1647 = vunpack.c.l.b16 %v1474
    %v1648 = vunpack.c.h.b16 %v1474
    %v1649 = vunpack.c.l.b16 %v1475
    %v1650 = vunpack.c.h.b16 %v1475
    %v1651 = vunpack.c.l.b16 %v1476
    %v1652 = vunpack.c.h.b16 %v1476
    %v1653 = vunpack.c.l.b16 %v1477
    %v1654 = vunpack.c.h.b16 %v1477
    %v1655 = vunpack.c.l.b16 %v1478
    %v1656 = vunpack.c.h.b16 %v1478
    %v1657 = vunpack.c.l.b16 %v1479
    %v1658 = vunpack.c.h.b16 %v1479
    %v1659 = vunpack.c.l.b16 %v1480
    %v1660 = vunpack.c.h.b16 %v1480
    %v1661 = vunpack.c.l.b16 %v1481
    %v1662 = vunpack.c.h.b16 %v1481
    %v1663 = vunpack.c.l.b16 %v1482
    %v1664 = vunpack.c.h.b16 %v1482
    %v1665 = vunpack.c.l.b16 %v1483
    %v1666 = vunpack.c.h.b16 %v1483
    %v1667 = vunpack.c.l.b16 %v1484
    %v1668 = vunpack.c.h.b16 %v1484
    %v1669 = vunpack.c.l.b16 %v1485
    %v1670 = vunpack.c.h.b16 %v1485
    %v1671 = vunpack.c.l.b16 %v1486
    %v1672 = vunpack.c.h.b16 %v1486
    %v1673 = vunpack.c.l.b16 %v1487
    %v1674 = vunpack.c.h.b16 %v1487
    %v1675 = vunpack.c.l.b16 %v1488
    %v1676 = vunpack.c.h.b16 %v1488
    %v1677 = vunpack.c.l.b16 %v1489
    %v1678 = vunpack.c.h.b16 %v1489
    %v1679 = vunpack.c.l.b16 %v1490
    %v1680 = vunpack.c.h.b16 %v1490
    %v1681 = vunpack.c.l.b16 %v1491
    %v1682 = vunpack.c.h.b16 %v1491
    %v1683 = vunpack.c.l.b16 %v1492
    %v1684 = vunpack.c.h.b16 %v1492
    %v1685 = vunpack.c.l.b16 %v1493
    %v1686 = vunpack.c.h.b16 %v1493
    %v1687 = vunpack.c.l.b16 %v1494
    %v1688 = vunpack.c.h.b16 %v1494
    %v1689 = vunpack.c.l.b16 %v1495
    %v1690 = vunpack.c.h.b16 %v1495
    %v1691 = vunpack.c.l.b16 %v1496
    %v1692 = vunpack.c.h.b16 %v1496
    %v1693 = vunpack.c.l.b16 %v1497
    %v1694 = vunpack.c.h.b16 %v1497
    %v1695 = vunpack.c.l.b16 %v1498
    %v1696 = vunpack.c.h.b16 %v1498
    %v1697 = vunpack.c.l.b16 %v1499
    %v1698 = vunpack.c.h.b16 %v1499
    %v1699 = vunpack.c.l.b16 %v1500
    %v1700 = vunpack.c.h.b16 %v1500
    %v1701 = vunpack.c.l.b16 %v1501
    %v1702 = vunpack.c.h.b16 %v1501
    %v1703 = vunpack.c.l.b16 %v1502
    %v1704 = vunpack.c.h.b16 %v1502
    %v1705 = vunpack.c.l.b16 %v1503
    %v1706 = vunpack.c.h.b16 %v1503
    %v1707 = vunpack.c.l.b16 %v1504
    %v1708 = vunpack.c.h.b16 %v1504
    %v1709 = vunpack.c.l.b16 %v1505
    %v1710 = vunpack.c.h.b16 %v1505
    %v1711 = vunpack.c.l.b16 %v1506
    %v1712 = vunpack.c.h.b16 %v1506
    %v1713 = vunpack.c.l.b16 %v1507
    %v1714 = vunpack.c.h.b16 %v1507
    %v1715 = vunpack.c.l.b16 %v1508
    %v1716 = vunpack.c.h.b16 %v1508
    %v1717 = vunpack.c.l.b16 %v1509
    %v1718 = vunpack.c.h.b16 %v1509
    %v1719 = vunpack.c.l.b16 %v1510
    %v1720 = vunpack.c.h.b16 %v1510
    %v1721 = vunpack.c.l.b16 %v1511
    %v1722 = vunpack.c.h.b16 %v1511
    %v1723 = vunpack.c.l.b16 %v1512
    %v1724 = vunpack.c.h.b16 %v1512
    %v1725 = vunpack.c.l.b16 %v1513
    %v1726 = vunpack.c.h.b16 %v1513
    %v1727 = vunpack.c.l.b16 %v1514
    %v1728 = vunpack.c.h.b16 %v1514
    %v1729 = vunpack.c.l.b16 %v1515
    %v1730 = vunpack.c.h.b16 %v1515
    %v1731 = vunpack.c.l.b16 %v1516
    %v1732 = vunpack.c.h.b16 %v1516
    %v1733 = vunpack.c.l.b16 %v1517
    %v1734 = vunpack.c.h.b16 %v1517
    %v1735 = vunpack.c.l.b16 %v1518
    %v1736 = vunpack.c.h.b16 %v1518
    %v1737 = vunpack.c.l.b16 %v1519
    %v1738 = vunpack.c.h.b16 %v1519
    %v1739 = vunpack.c.l.b16 %v1520
    %v1740 = vunpack.c.h.b16 %v1520
    %v1741 = vunpack.c.l.b16 %v1521
    %v1742 = vunpack.c.h.b16 %v1521
    %v1743 = vunpack.c.l.b16 %v1522
    %v1744 = vunpack.c.h.b16 %v1522
    %v1745 = vunpack.c.l.b16 %v1523
    %v1746 = vunpack.c.h.b16 %v1523
    %v1747 = vunpack.c.l.b16 %v1524
    %v1748 = vunpack.c.h.b16 %v1524
    %v1749 = vunpack.c.l.b16 %v1525
    %v1750 = vunpack.c.h.b16 %v1525
    %v1751 = vunpack.c.l.b16 %v1526
    %v1752 = vunpack.c.h.b16 %v1526
    %v1753 = vunpack.c.l.b16 %v1527
    %v1754 = vunpack.c.h.b16 %v1527
    %v1755 = vunpack.c.l.b16 %v1528
    %v1756 = vunpack.c.h.b16 %v1528
    %v1757 = vunpack.c.l.b16 %v1529
    %v1758 = vunpack.c.h.b16 %v1529
    %v1759 = vunpack.c.l.b16 %v1530
    %v1760 = vunpack.c.h.b16 %v1530
    %v1761 = vunpack.c.l.b16 %v1531
    %v1762 = vunpack.c.h.b16 %v1531
    %v1763 = vunpack.c.l.b16 %v1532
    %v1764 = vunpack.c.h.b16 %v1532
    %v1765 = vunpack.c.l.b16 %v1533
    %v1766 = vunpack.c.h.b16 %v1533
    %v1767 = vunpack.c.l.b16 %v1534
    %v1768 = vunpack.c.h.b16 %v1534
    %v1769 = vunpack.c.l.b16 %v1535
    %v1770 = vunpack.c.h.b16 %v1535
    %v1771 = vunpack.c.l.b16 %v1536
    %v1772 = vunpack.c.h.b16 %v1536
    %v1773 = vunpack.c.l.b16 %v1537
    %v1774 = vunpack.c.h.b16 %v1537
    %v1775 = vunpack.c.l.b16 %v1538
    %v1776 = vunpack.c.h.b16 %v1538
    %v1777 = vunpack.c.l.b16 %v1539
    %v1778 = vunpack.c.h.b16 %v1539
    %v1779 = vunpack.c.l.b16 %v1540
    %v1780 = vunpack.c.h.b16 %v1540
    %v1781 = vunpack.c.l.b16 %v1541
    %v1782 = vunpack.c.h.b16 %v1541
    %v1783 = vunpack.c.l.b16 %v1542
    %v1784 = vunpack.c.h.b16 %v1542
    %v1785 = vunpack.c.l.b16 %v1543
    %v1786 = vunpack.c.h.b16 %v1543
    %v1787 = vunpack.c.l.b16 %v1544
    %v1788 = vunpack.c.h.b16 %v1544
    %v1789 = vunpack.c.l.b16 %v1545
    %v1790 = vunpack.c.h.b16 %v1545
    %v1791 = vunpack.c.l.b16 %v1546
    %v1792 = vunpack.c.h.b16 %v1546
    %v1793 = vunpack.c.l.b16 %v1547
    %v1794 = vunpack.c.h.b16 %v1547
    %v1795 = vunpack.c.l.b16 %v1548
    %v1796 = vunpack.c.h.b16 %v1548
    %v1797 = vunpack.c.l.b16 %v1549
    %v1798 = vunpack.c.h.b16 %v1549
    %v1799 = vunpack.c.l.b16 %v1550
    %v1800 = vunpack.c.h.b16 %v1550
    %v1801 = vunpack.c.l.b16 %v1551
    %v1802 = vunpack.c.h.b16 %v1551
    %v1803 = vunpack.c.l.b16 %v1552
    %v1804 = vunpack.c.h.b16 %v1552
    %v1805 = vpack.c.b16 %v1647, %v1645
    %v1806 = vpack.c.b16 %v1648, %v1646
    %v1807 = vpack.c.b16 %v1651, %v1649
    %v1808 = vpack.c.b16 %v1652, %v1650
    %v1809 = vpack.c.b16 %v1655, %v1653
    %v1810 = vpack.c.b16 %v1656, %v1654
    %v1811 = vpack.c.b16 %v1659, %v1657
    %v1812 = vpack.c.b16 %v1660, %v1658
    %v1813 = vpack.c.b16 %v1663, %v1661
    %v1814 = vpack.c.b16 %v1664, %v1662
    %v1815 = vpack.c.b16 %v1667, %v1665
    %v1816 = vpack.c.b16 %v1668, %v1666
    %v1817 = vpack.c.b16 %v1671, %v1669
    %v1818 = vpack.c.b16 %v1672, %v1670
    %v1819 = vpack.c.b16 %v1675, %v1673
    %v1820 = vpack.c.b16 %v1676, %v1674
    %v1821 = vpack.c.b16 %v1679, %v1677
    %v1822 = vpack.c.b16 %v1680, %v1678
    %v1823 = vpack.c.b16 %v1683, %v1681
    %v1824 = vpack.c.b16 %v1684, %v1682
    %v1825 = vpack.c.b16 %v1687, %v1685
    %v1826 = vpack.c.b16 %v1688, %v1686
    %v1827 = vpack.c.b16 %v1691, %v1689
    %v1828 = vpack.c.b16 %v1692, %v1690
    %v1829 = vpack.c.b16 %v1695, %v1693
    %v1830 = vpack.c.b16 %v1696, %v1694
    %v1831 = vpack.c.b16 %v1699, %v1697
    %v1832 = vpack.c.b16 %v1700, %v1698
    %v1833 = vpack.c.b16 %v1703, %v1701
    %v1834 = vpack.c.b16 %v1704, %v1702
    %v1835 = vpack.c.b16 %v1707, %v1705
    %v1836 = vpack.c.b16 %v1708, %v1706
    %v1837 = vpack.c.b16 %v1711, %v1709
    %v1838 = vpack.c.b16 %v1712, %v1710
    %v1839 = vpack.c.b16 %v1715, %v1713
    %v1840 = vpack.c.b16 %v1716, %v1714
    %v1841 = vpack.c.b16 %v1719, %v1717
    %v1842 = vpack.c.b16 %v1720, %v1718
    %v1843 = vpack.c.b16 %v1723, %v1721
    %v1844 = vpack.c.b16 %v1724, %v1722
    %v1845 = vpack.c.b16 %v1727, %v1725
    %v1846 = vpack.c.b16 %v1728, %v1726
    %v1847 = vpack.c.b16 %v1731, %v1729
    %v1848 = vpack.c.b16 %v1732, %v1730
    %v1849 = vpack.c.b16 %v1735, %v1733
    %v1850 = vpack.c.b16 %v1736, %v1734
    %v1851 = vpack.c.b16 %v1739, %v1737
    %v1852 = vpack.c.b16 %v1740, %v1738
    %v1853 = vpack.c.b16 %v1743, %v1741
    %v1854 = vpack.c.b16 %v1744, %v1742
    %v1855 = vpack.c.b16 %v1747, %v1745
    %v1856 = vpack.c.b16 %v1748, %v1746
    %v1857 = vpack.c.b16 %v1751, %v1749
    %v1858 = vpack.c.b16 %v1752, %v1750
    %v1859 = vpack.c.b16 %v1755, %v1753
    %v1860 = vpack.c.b16 %v1756, %v1754
    %v1861 = vpack.c.b16 %v1759, %v1757
    %v1862 = vpack.c.b16 %v1760, %v1758
    %v1863 = vpack.c.b16 %v1763, %v1761
    %v1864 = vpack.c.b16 %v1764, %v1762
    %v1865 = vpack.c.b16 %v1767, %v1765
    %v1866 = vpack.c.b16 %v1768, %v1766
    %v1867 = vpack.c.b16 %v1771, %v1769
    %v1868 = vpack.c.b16 %v1772, %v1770
    %v1869 = vpack.c.b16 %v1775, %v1773
    %v1870 = vpack.c.b16 %v1776, %v1774
    %v1871 = vpack.c.b16 %v1779, %v1777
    %v1872 = vpack.c.b16 %v1780, %v1778
    %v1873 = vpack.c.b16 %v1783, %v1781
    %v1874 = vpack.c.b16 %v1784, %v1782
    %v1875 = vpack.c.b16 %v1787, %v1785
    %v1876 = vpack.c.b16 %v1788, %v1786
    %v1877 = vpack.c.b16 %v1791, %v1789
    %v1878 = vpack.c.b16 %v1792, %v1790
    %v1879 = vpack.c.b16 %v1795, %v1793
    %v1880 = vpack.c.b16 %v1796, %v1794
    %v1881 = vpack.c.b16 %v1799, %v1797
    %v1882 = vpack.c.b16 %v1800, %v1798
    %v1883 = vpack.c.b16 %v1803, %v1801
    %v1884 = vpack.c.b16 %v1804, %v1802
    %1965 = vmatprep.subr.bf16.mxu0 %v1806
    %1966 = vmatpush1.bf16.msra.mxu0 %v1805
    %1967 = vmatprep.subr.bf16.mxu0 %v1808
    %1968 = vmatpush1.bf16.msra.mxu0 %v1807
    %1969 = vmatprep.subr.bf16.mxu0 %v1810
    %1970 = vmatpush1.bf16.msra.mxu0 %v1809
    %1971 = vmatprep.subr.bf16.mxu0 %v1812
    %1972 = vmatpush1.bf16.msra.mxu0 %v1811
    %1973 = vmatprep.subr.bf16.mxu0 %v1814
    %1974 = vmatpush1.bf16.msra.mxu0 %v1813
    %1975 = vmatprep.subr.bf16.mxu0 %v1816
    %1976 = vmatpush1.bf16.msra.mxu0 %v1815
    %1977 = vmatprep.subr.bf16.mxu0 %v1818
    %1978 = vmatpush1.bf16.msra.mxu0 %v1817
    %1979 = vmatprep.subr.bf16.mxu0 %v1820
    %1980 = vmatpush1.bf16.msra.mxu0 %v1819
    %1981 = vmatprep.subr.bf16.mxu0 %v1822
    %1982 = vmatpush1.bf16.msra.mxu0 %v1821
    %1983 = vmatprep.subr.bf16.mxu0 %v1824
    %1984 = vmatpush1.bf16.msra.mxu0 %v1823
    %1985 = vmatprep.subr.bf16.mxu0 %v1826
    %1986 = vmatpush1.bf16.msra.mxu0 %v1825
    %1987 = vmatprep.subr.bf16.mxu0 %v1828
    %1988 = vmatpush1.bf16.msra.mxu0 %v1827
    %1989 = vmatprep.subr.bf16.mxu0 %v1830
    %1990 = vmatpush1.bf16.msra.mxu0 %v1829
    %1991 = vmatprep.subr.bf16.mxu0 %v1832
    %1992 = vmatpush1.bf16.msra.mxu0 %v1831
    %1993 = vmatprep.subr.bf16.mxu0 %v1834
    %1994 = vmatpush1.bf16.msra.mxu0 %v1833
    %1995 = vmatprep.subr.bf16.mxu0 %v1836
    %1996 = vmatpush1.bf16.msra.mxu0 %v1835
    %1997 = vmatprep.mubr.bf16.mxu0 %v1404
    %1998 = vmatmul.mubr.bf16.gmra.mrb[0].mxu0 %v1403
    %v1999 = vpop.f32.mrb[0].mxu0
    %v2000 = vadd.f32 %v1558, %v1999
    %v2001 = vpop.f32.mrb[0].mxu0
    %v2002 = vadd.f32 %v1562, %v2001
    %v2003 = vpop.f32.mrb[0].mxu0
    %v2004 = vadd.f32 %v1558, %v2003
    %v2005 = vpop.f32.mrb[0].mxu0
    %v2006 = vadd.f32 %v1562, %v2005
    %2007 = vmatprep.mubr.bf16.mxu0 %v1409
    %2008 = vmatmul.mubr.bf16.gmra.mrb[0].mxu0 %v1408
    %v2009 = vpop.f32.mrb[0].mxu0
    %v2010 = vadd.f32 %v1558, %v2009
    %v2011 = vpop.f32.mrb[0].mxu0
    %v2012 = vadd.f32 %v1562, %v2011
    %v2013 = vpop.f32.mrb[0].mxu0
    %v2014 = vadd.f32 %v1558, %v2013
    %v2015 = vpop.f32.mrb[0].mxu0
    %v2016 = vadd.f32 %v1562, %v2015
    %2017 = vmatprep.mubr.bf16.mxu0 %v1414
    %2018 = vmatmul.mubr.bf16.gmra.mrb[0].mxu0 %v1413
    %v2019 = vpop.f32.mrb[0].mxu0
    %v2020 = vadd.f32 %v1558, %v2019
    %v2021 = vpop.f32.mrb[0].mxu0
    %v2022 = vadd.f32 %v1562, %v2021
    %v2023 = vpop.f32.mrb[0].mxu0
    %v2024 = vadd.f32 %v1558, %v2023
    %v2025 = vpop.f32.mrb[0].mxu0
    %v2026 = vadd.f32 %v1562, %v2025
    %2027 = vmatprep.mubr.bf16.mxu0 %v1419
    %2028 = vmatmul.mubr.bf16.gmra.mrb[0].mxu0 %v1418
    %v2029 = vpop.f32.mrb[0].mxu0
    %v2030 = vadd.f32 %v1558, %v2029
    %v2031 = vpop.f32.mrb[0].mxu0
    %v2032 = vadd.f32 %v1562, %v2031
    %v2033 = vpop.f32.mrb[0].mxu0
    %v2034 = vadd.f32 %v1558, %v2033
    %v2035 = vpop.f32.mrb[0].mxu0
    %v2036 = vadd.f32 %v1562, %v2035
    %2037 = vmatprep.mubr.bf16.mxu0 %v1424
    %2038 = vmatmul.mubr.bf16.gmra.mrb[0].mxu0 %v1423
    %v2039 = vpop.f32.mrb[0].mxu0
    %v2040 = vadd.f32 %v1558, %v2039
    %v2041 = vpop.f32.mrb[0].mxu0
    %v2042 = vadd.f32 %v1562, %v2041
    %v2043 = vpop.f32.mrb[0].mxu0
    %v2044 = vadd.f32 %v1558, %v2043
    %v2045 = vpop.f32.mrb[0].mxu0
    %v2046 = vadd.f32 %v1562, %v2045
    %2047 = vmatprep.mubr.bf16.mxu0 %v1429
    %2048 = vmatmul.mubr.bf16.gmra.mrb[0].mxu0 %v1428
    %v2049 = vpop.f32.mrb[0].mxu0
    %v2050 = vadd.f32 %v1558, %v2049
    %v2051 = vpop.f32.mrb[0].mxu0
    %v2052 = vadd.f32 %v1562, %v2051
    %v2053 = vpop.f32.mrb[0].mxu0
    %v2054 = vadd.f32 %v1558, %v2053
    %v2055 = vpop.f32.mrb[0].mxu0
    %v2056 = vadd.f32 %v1562, %v2055
    %2057 = vmatprep.mubr.bf16.mxu0 %v1434
    %2058 = vmatmul.mubr.bf16.gmra.mrb[0].mxu0 %v1433
    %v2059 = vpop.f32.mrb[0].mxu0
    %v2060 = vadd.f32 %v1558, %v2059
    %v2061 = vpop.f32.mrb[0].mxu0
    %v2062 = vadd.f32 %v1562, %v2061
    %v2063 = vpop.f32.mrb[0].mxu0
    %v2064 = vadd.f32 %v1558, %v2063
    %v2065 = vpop.f32.mrb[0].mxu0
    %v2066 = vadd.f32 %v1562, %v2065
    %2067 = vmatprep.mubr.bf16.mxu0 %v1439
    %2068 = vmatmul.mubr.bf16.gmra.mrb[0].mxu0 %v1438
    %v2069 = vpop.f32.mrb[0].mxu0
    %v2070 = vadd.f32 %v1558, %v2069
    %v2071 = vpop.f32.mrb[0].mxu0
    %v2072 = vadd.f32 %v1562, %v2071
    %v2073 = vpop.f32.mrb[0].mxu0
    %v2074 = vadd.f32 %v1558, %v2073
    %v2075 = vpop.f32.mrb[0].mxu0
    %v2076 = vadd.f32 %v1562, %v2075
    %2077 = vmatprep.mubr.bf16.mxu0 %v1444
    %2078 = vmatmul.mubr.bf16.gmra.mrb[0].mxu0 %v1443
    %v2079 = vpop.f32.mrb[0].mxu0
    %v2080 = vadd.f32 %v1558, %v2079
    %v2081 = vpop.f32.mrb[0].mxu0
    %v2082 = vadd.f32 %v1562, %v2081
    %v2083 = vpop.f32.mrb[0].mxu0
    %v2084 = vadd.f32 %v1558, %v2083
    %v2085 = vpop.f32.mrb[0].mxu0
    %v2086 = vadd.f32 %v1562, %v2085
    %2087 = vmatprep.mubr.bf16.mxu0 %v1449
    %2088 = vmatmul.mubr.bf16.gmra.mrb[0].mxu0 %v1448
    %v2089 = vpop.f32.mrb[0].mxu0
    %v2090 = vadd.f32 %v1558, %v2089
    %v2091 = vpop.f32.mrb[0].mxu0
    %v2092 = vadd.f32 %v1562, %v2091
    %v2093 = vpop.f32.mrb[0].mxu0
    %v2094 = vadd.f32 %v1558, %v2093
    %v2095 = vpop.f32.mrb[0].mxu0
    %v2096 = vadd.f32 %v1562, %v2095
    %2097 = vmatprep.mubr.bf16.mxu0 %v1454
    %2098 = vmatmul.mubr.bf16.gmra.mrb[0].mxu0 %v1453
    %v2099 = vpop.f32.mrb[0].mxu0
    %v2100 = vadd.f32 %v1558, %v2099
    %v2101 = vpop.f32.mrb[0].mxu0
    %v2102 = vadd.f32 %v1562, %v2101
    %v2103 = vpop.f32.mrb[0].mxu0
    %v2104 = vadd.f32 %v1558, %v2103
    %v2105 = vpop.f32.mrb[0].mxu0
    %v2106 = vadd.f32 %v1562, %v2105
    %2107 = vmatprep.mubr.bf16.mxu0 %v1459
    %2108 = vmatmul.mubr.bf16.gmra.mrb[0].mxu0 %v1458
    %v2109 = vpop.f32.mrb[0].mxu0
    %v2110 = vadd.f32 %v1558, %v2109
    %v2111 = vpop.f32.mrb[0].mxu0
    %v2112 = vadd.f32 %v1562, %v2111
    %v2113 = vpop.f32.mrb[0].mxu0
    %v2114 = vadd.f32 %v1558, %v2113
    %v2115 = vpop.f32.mrb[0].mxu0
    %v2116 = vadd.f32 %v1562, %v2115
    %2117 = vmatprep.mubr.bf16.mxu0 %v1464
    %2118 = vmatmul.mubr.bf16.gmra.mrb[0].mxu0 %v1463
    %v2119 = vpop.f32.mrb[0].mxu0
    %v2120 = vadd.f32 %v1558, %v2119
    %v2121 = vpop.f32.mrb[0].mxu0
    %v2122 = vadd.f32 %v1562, %v2121
    %v2123 = vpop.f32.mrb[0].mxu0
    %v2124 = vadd.f32 %v1558, %v2123
    %v2125 = vpop.f32.mrb[0].mxu0
    %v2126 = vadd.f32 %v1562, %v2125
    %2127 = vmatprep.mubr.bf16.mxu0 %v1469
    %2128 = vmatmul.mubr.bf16.gmra.mrb[0].mxu0 %v1468
    %v2129 = vpop.f32.mrb[0].mxu0
    %v2130 = vadd.f32 %v1558, %v2129
    %v2131 = vpop.f32.mrb[0].mxu0
    %v2132 = vadd.f32 %v1562, %v2131
    %v2133 = vpop.f32.mrb[0].mxu0
    %v2134 = vadd.f32 %v1558, %v2133
    %v2135 = vpop.f32.mrb[0].mxu0
    %v2136 = vadd.f32 %v1562, %v2135
    %2137 = vdwg.mxu0
    %2138 = vmatprep.subr.bf16.mxu0 %v1838
    %2139 = vmatpush1.bf16.msra.mxu0 %v1837
    %2140 = vmatprep.subr.bf16.mxu0 %v1840
    %2141 = vmatpush1.bf16.msra.mxu0 %v1839
    %2142 = vmatprep.subr.bf16.mxu0 %v1842
    %2143 = vmatpush1.bf16.msra.mxu0 %v1841
    %2144 = vmatprep.subr.bf16.mxu0 %v1844
    %2145 = vmatpush1.bf16.msra.mxu0 %v1843
    %2146 = vmatprep.subr.bf16.mxu0 %v1846
    %2147 = vmatpush1.bf16.msra.mxu0 %v1845
    %2148 = vmatprep.subr.bf16.mxu0 %v1848
    %2149 = vmatpush1.bf16.msra.mxu0 %v1847
    %2150 = vmatprep.subr.bf16.mxu0 %v1850
    %2151 = vmatpush1.bf16.msra.mxu0 %v1849
    %2152 = vmatprep.subr.bf16.mxu0 %v1852
    %2153 = vmatpush1.bf16.msra.mxu0 %v1851
    %2154 = vmatprep.subr.bf16.mxu0 %v1854
    %2155 = vmatpush1.bf16.msra.mxu0 %v1853
    %2156 = vmatprep.subr.bf16.mxu0 %v1856
    %2157 = vmatpush1.bf16.msra.mxu0 %v1855
    %2158 = vmatprep.subr.bf16.mxu0 %v1858
    %2159 = vmatpush1.bf16.msra.mxu0 %v1857
    %2160 = vmatprep.subr.bf16.mxu0 %v1860
    %2161 = vmatpush1.bf16.msra.mxu0 %v1859
    %2162 = vmatprep.subr.bf16.mxu0 %v1862
    %2163 = vmatpush1.bf16.msra.mxu0 %v1861
    %2164 = vmatprep.subr.bf16.mxu0 %v1864
    %2165 = vmatpush1.bf16.msra.mxu0 %v1863
    %2166 = vmatprep.subr.bf16.mxu0 %v1866
    %2167 = vmatpush1.bf16.msra.mxu0 %v1865
    %2168 = vmatprep.subr.bf16.mxu0 %v1868
    %2169 = vmatpush1.bf16.msra.mxu0 %v1867
    %2170 = vmatprep.mubr.bf16.mxu0 %v1406
    %2171 = vmatmul.mubr.bf16.gmra.mrb[0].mxu0 %v1405
    %v2172 = vpop.f32.mrb[0].mxu0
    %v2173 = vadd.f32 %v2000, %v2172
    %v2174 = vpop.f32.mrb[0].mxu0
    %v2175 = vadd.f32 %v2002, %v2174
    %v2176 = vpop.f32.mrb[0].mxu0
    %v2177 = vadd.f32 %v2004, %v2176
    %v2178 = vpop.f32.mrb[0].mxu0
    %v2179 = vadd.f32 %v2006, %v2178
    %2180 = vmatprep.mubr.bf16.mxu0 %v1411
    %2181 = vmatmul.mubr.bf16.gmra.mrb[0].mxu0 %v1410
    %v2182 = vpop.f32.mrb[0].mxu0
    %v2183 = vadd.f32 %v2010, %v2182
    %v2184 = vpop.f32.mrb[0].mxu0
    %v2185 = vadd.f32 %v2012, %v2184
    %v2186 = vpop.f32.mrb[0].mxu0
    %v2187 = vadd.f32 %v2014, %v2186
    %v2188 = vpop.f32.mrb[0].mxu0
    %v2189 = vadd.f32 %v2016, %v2188
    %2190 = vmatprep.mubr.bf16.mxu0 %v1416
    %2191 = vmatmul.mubr.bf16.gmra.mrb[0].mxu0 %v1415
    %v2192 = vpop.f32.mrb[0].mxu0
    %v2193 = vadd.f32 %v2020, %v2192
    %v2194 = vpop.f32.mrb[0].mxu0
    %v2195 = vadd.f32 %v2022, %v2194
    %v2196 = vpop.f32.mrb[0].mxu0
    %v2197 = vadd.f32 %v2024, %v2196
    %v2198 = vpop.f32.mrb[0].mxu0
    %v2199 = vadd.f32 %v2026, %v2198
    %2200 = vmatprep.mubr.bf16.mxu0 %v1421
    %2201 = vmatmul.mubr.bf16.gmra.mrb[0].mxu0 %v1420
    %v2202 = vpop.f32.mrb[0].mxu0
    %v2203 = vadd.f32 %v2030, %v2202
    %v2204 = vpop.f32.mrb[0].mxu0
    %v2205 = vadd.f32 %v2032, %v2204
    %v2206 = vpop.f32.mrb[0].mxu0
    %v2207 = vadd.f32 %v2034, %v2206
    %v2208 = vpop.f32.mrb[0].mxu0
    %v2209 = vadd.f32 %v2036, %v2208
    %2210 = vmatprep.mubr.bf16.mxu0 %v1426
    %2211 = vmatmul.mubr.bf16.gmra.mrb[0].mxu0 %v1425
    %v2212 = vpop.f32.mrb[0].mxu0
    %v2213 = vadd.f32 %v2040, %v2212
    %v2214 = vpop.f32.mrb[0].mxu0
    %v2215 = vadd.f32 %v2042, %v2214
    %v2216 = vpop.f32.mrb[0].mxu0
    %v2217 = vadd.f32 %v2044, %v2216
    %v2218 = vpop.f32.mrb[0].mxu0
    %v2219 = vadd.f32 %v2046, %v2218
    %2220 = vmatprep.mubr.bf16.mxu0 %v1431
    %2221 = vmatmul.mubr.bf16.gmra.mrb[0].mxu0 %v1430
    %v2222 = vpop.f32.mrb[0].mxu0
    %v2223 = vadd.f32 %v2050, %v2222
    %v2224 = vpop.f32.mrb[0].mxu0
    %v2225 = vadd.f32 %v2052, %v2224
    %v2226 = vpop.f32.mrb[0].mxu0
    %v2227 = vadd.f32 %v2054, %v2226
    %v2228 = vpop.f32.mrb[0].mxu0
    %v2229 = vadd.f32 %v2056, %v2228
    %2230 = vmatprep.mubr.bf16.mxu0 %v1436
    %2231 = vmatmul.mubr.bf16.gmra.mrb[0].mxu0 %v1435
    %v2232 = vpop.f32.mrb[0].mxu0
    %v2233 = vadd.f32 %v2060, %v2232
    %v2234 = vpop.f32.mrb[0].mxu0
    %v2235 = vadd.f32 %v2062, %v2234
    %v2236 = vpop.f32.mrb[0].mxu0
    %v2237 = vadd.f32 %v2064, %v2236
    %v2238 = vpop.f32.mrb[0].mxu0
    %v2239 = vadd.f32 %v2066, %v2238
    %2240 = vmatprep.mubr.bf16.mxu0 %v1441
    %2241 = vmatmul.mubr.bf16.gmra.mrb[0].mxu0 %v1440
    %v2242 = vpop.f32.mrb[0].mxu0
    %v2243 = vadd.f32 %v2070, %v2242
    %v2244 = vpop.f32.mrb[0].mxu0
    %v2245 = vadd.f32 %v2072, %v2244
    %v2246 = vpop.f32.mrb[0].mxu0
    %v2247 = vadd.f32 %v2074, %v2246
    %v2248 = vpop.f32.mrb[0].mxu0
    %v2249 = vadd.f32 %v2076, %v2248
    %2250 = vmatprep.mubr.bf16.mxu0 %v1446
    %2251 = vmatmul.mubr.bf16.gmra.mrb[0].mxu0 %v1445
    %v2252 = vpop.f32.mrb[0].mxu0
    %v2253 = vadd.f32 %v2080, %v2252
    %v2254 = vpop.f32.mrb[0].mxu0
    %v2255 = vadd.f32 %v2082, %v2254
    %v2256 = vpop.f32.mrb[0].mxu0
    %v2257 = vadd.f32 %v2084, %v2256
    %v2258 = vpop.f32.mrb[0].mxu0
    %v2259 = vadd.f32 %v2086, %v2258
    %2260 = vmatprep.mubr.bf16.mxu0 %v1451
    %2261 = vmatmul.mubr.bf16.gmra.mrb[0].mxu0 %v1450
    %v2262 = vpop.f32.mrb[0].mxu0
    %v2263 = vadd.f32 %v2090, %v2262
    %v2264 = vpop.f32.mrb[0].mxu0
    %v2265 = vadd.f32 %v2092, %v2264
    %v2266 = vpop.f32.mrb[0].mxu0
    %v2267 = vadd.f32 %v2094, %v2266
    %v2268 = vpop.f32.mrb[0].mxu0
    %v2269 = vadd.f32 %v2096, %v2268
    %2270 = vmatprep.mubr.bf16.mxu0 %v1456
    %2271 = vmatmul.mubr.bf16.gmra.mrb[0].mxu0 %v1455
    %v2272 = vpop.f32.mrb[0].mxu0
    %v2273 = vadd.f32 %v2100, %v2272
    %v2274 = vpop.f32.mrb[0].mxu0
    %v2275 = vadd.f32 %v2102, %v2274
    %v2276 = vpop.f32.mrb[0].mxu0
    %v2277 = vadd.f32 %v2104, %v2276
    %v2278 = vpop.f32.mrb[0].mxu0
    %v2279 = vadd.f32 %v2106, %v2278
    %2280 = vmatprep.mubr.bf16.mxu0 %v1461
    %2281 = vmatmul.mubr.bf16.gmra.mrb[0].mxu0 %v1460
    %v2282 = vpop.f32.mrb[0].mxu0
    %v2283 = vadd.f32 %v2110, %v2282
    %v2284 = vpop.f32.mrb[0].mxu0
    %v2285 = vadd.f32 %v2112, %v2284
    %v2286 = vpop.f32.mrb[0].mxu0
    %v2287 = vadd.f32 %v2114, %v2286
    %v2288 = vpop.f32.mrb[0].mxu0
    %v2289 = vadd.f32 %v2116, %v2288
    %2290 = vmatprep.mubr.bf16.mxu0 %v1466
    %2291 = vmatmul.mubr.bf16.gmra.mrb[0].mxu0 %v1465
    %v2292 = vpop.f32.mrb[0].mxu0
    %v2293 = vadd.f32 %v2120, %v2292
    %v2294 = vpop.f32.mrb[0].mxu0
    %v2295 = vadd.f32 %v2122, %v2294
    %v2296 = vpop.f32.mrb[0].mxu0
    %v2297 = vadd.f32 %v2124, %v2296
    %v2298 = vpop.f32.mrb[0].mxu0
    %v2299 = vadd.f32 %v2126, %v2298
    %2300 = vmatprep.mubr.bf16.mxu0 %v1471
    %2301 = vmatmul.mubr.bf16.gmra.mrb[0].mxu0 %v1470
    %v2302 = vpop.f32.mrb[0].mxu0
    %v2303 = vadd.f32 %v2130, %v2302
    %v2304 = vpop.f32.mrb[0].mxu0
    %v2305 = vadd.f32 %v2132, %v2304
    %v2306 = vpop.f32.mrb[0].mxu0
    %v2307 = vadd.f32 %v2134, %v2306
    %v2308 = vpop.f32.mrb[0].mxu0
    %v2309 = vadd.f32 %v2136, %v2308
    %2310 = vdwg.mxu0
    %2311 = vmatprep.subr.bf16.mxu0 %v1870
    %2312 = vmatpush1.bf16.msra.mxu0 %v1869
    %2313 = vmatprep.subr.bf16.mxu0 %v1872
    %2314 = vmatpush1.bf16.msra.mxu0 %v1871
    %2315 = vmatprep.subr.bf16.mxu0 %v1874
    %2316 = vmatpush1.bf16.msra.mxu0 %v1873
    %2317 = vmatprep.subr.bf16.mxu0 %v1876
    %2318 = vmatpush1.bf16.msra.mxu0 %v1875
    %2319 = vmatprep.subr.bf16.mxu0 %v1878
    %2320 = vmatpush1.bf16.msra.mxu0 %v1877
    %2321 = vmatprep.subr.bf16.mxu0 %v1880
    %2322 = vmatpush1.bf16.msra.mxu0 %v1879
    %2323 = vmatprep.subr.bf16.mxu0 %v1882
    %2324 = vmatpush1.bf16.msra.mxu0 %v1881
    %2325 = vmatprep.subr.bf16.mxu0 %v1884
    %2326 = vmatpush1.bf16.msra.mxu0 %v1883
    %2327 = vmatprep.subr.bf16.mxu0 0
    %2328 = vmatpush1.bf16.msra.mxu0 0
    %2329 = vmatprep.subr.bf16.mxu0 0
    %2330 = vmatpush1.bf16.msra.mxu0 0
    %2331 = vmatprep.subr.bf16.mxu0 0
    %2332 = vmatpush1.bf16.msra.mxu0 0
    %2333 = vmatprep.subr.bf16.mxu0 0
    %2334 = vmatpush1.bf16.msra.mxu0 0
    %2335 = vmatprep.subr.bf16.mxu0 0
    %2336 = vmatpush1.bf16.msra.mxu0 0
    %2337 = vmatprep.subr.bf16.mxu0 0
    %2338 = vmatpush1.bf16.msra.mxu0 0
    %2339 = vmatprep.subr.bf16.mxu0 0
    %2340 = vmatpush1.bf16.msra.mxu0 0
    %2341 = vmatprep.subr.bf16.mxu0 0
    %2342 = vmatpush1.bf16.msra.mxu0 0
    %2343 = vmatprep.mubr.bf16.mxu0 0
    %2344 = vmatmul.mubr.bf16.gmra.mrb[0].mxu0 %v1407
    %v2345 = vpop.f32.mrb[0].mxu0
    %v2346 = vadd.f32 %v2173, %v2345
    %v2347 = vpop.f32.mrb[0].mxu0
    %v2348 = vadd.f32 %v2175, %v2347
    %v2349 = vpop.f32.mrb[0].mxu0
    %v2350 = vadd.f32 %v2177, %v2349
    %v2351 = vpop.f32.mrb[0].mxu0
    %v2352 = vadd.f32 %v2179, %v2351
    %2353 = vmatprep.mubr.bf16.mxu0 0
    %2354 = vmatmul.mubr.bf16.gmra.mrb[0].mxu0 %v1412
    %v2355 = vpop.f32.mrb[0].mxu0
    %v2356 = vadd.f32 %v2183, %v2355
    %v2357 = vpop.f32.mrb[0].mxu0
    %v2358 = vadd.f32 %v2185, %v2357
    %v2359 = vpop.f32.mrb[0].mxu0
    %v2360 = vadd.f32 %v2187, %v2359
    %v2361 = vpop.f32.mrb[0].mxu0
    %v2362 = vadd.f32 %v2189, %v2361
    %2363 = vmatprep.mubr.bf16.mxu0 0
    %2364 = vmatmul.mubr.bf16.gmra.mrb[0].mxu0 %v1417
    %v2365 = vpop.f32.mrb[0].mxu0
    %v2366 = vadd.f32 %v2193, %v2365
    %v2367 = vpop.f32.mrb[0].mxu0
    %v2368 = vadd.f32 %v2195, %v2367
    %v2369 = vpop.f32.mrb[0].mxu0
    %v2370 = vadd.f32 %v2197, %v2369
    %v2371 = vpop.f32.mrb[0].mxu0
    %v2372 = vadd.f32 %v2199, %v2371
    %2373 = vmatprep.mubr.bf16.mxu0 0
    %2374 = vmatmul.mubr.bf16.gmra.mrb[0].mxu0 %v1422
    %v2375 = vpop.f32.mrb[0].mxu0
    %v2376 = vadd.f32 %v2203, %v2375
    %v2377 = vpop.f32.mrb[0].mxu0
    %v2378 = vadd.f32 %v2205, %v2377
    %v2379 = vpop.f32.mrb[0].mxu0
    %v2380 = vadd.f32 %v2207, %v2379
    %v2381 = vpop.f32.mrb[0].mxu0
    %v2382 = vadd.f32 %v2209, %v2381
    %2383 = vmatprep.mubr.bf16.mxu0 0
    %2384 = vmatmul.mubr.bf16.gmra.mrb[0].mxu0 %v1427
    %v2385 = vpop.f32.mrb[0].mxu0
    %v2386 = vadd.f32 %v2213, %v2385
    %v2387 = vpop.f32.mrb[0].mxu0
    %v2388 = vadd.f32 %v2215, %v2387
    %v2389 = vpop.f32.mrb[0].mxu0
    %v2390 = vadd.f32 %v2217, %v2389
    %v2391 = vpop.f32.mrb[0].mxu0
    %v2392 = vadd.f32 %v2219, %v2391
    %2393 = vmatprep.mubr.bf16.mxu0 0
    %2394 = vmatmul.mubr.bf16.gmra.mrb[0].mxu0 %v1432
    %v2395 = vpop.f32.mrb[0].mxu0
    %v2396 = vadd.f32 %v2223, %v2395
    %v2397 = vpop.f32.mrb[0].mxu0
    %v2398 = vadd.f32 %v2225, %v2397
    %v2399 = vpop.f32.mrb[0].mxu0
    %v2400 = vadd.f32 %v2227, %v2399
    %v2401 = vpop.f32.mrb[0].mxu0
    %v2402 = vadd.f32 %v2229, %v2401
    %2403 = vmatprep.mubr.bf16.mxu0 0
    %2404 = vmatmul.mubr.bf16.gmra.mrb[0].mxu0 %v1437
    %v2405 = vpop.f32.mrb[0].mxu0
    %v2406 = vadd.f32 %v2233, %v2405
    %v2407 = vpop.f32.mrb[0].mxu0
    %v2408 = vadd.f32 %v2235, %v2407
    %v2409 = vpop.f32.mrb[0].mxu0
    %v2410 = vadd.f32 %v2237, %v2409
    %v2411 = vpop.f32.mrb[0].mxu0
    %v2412 = vadd.f32 %v2239, %v2411
    %2413 = vmatprep.mubr.bf16.mxu0 0
    %2414 = vmatmul.mubr.bf16.gmra.mrb[0].mxu0 %v1442
    %v2415 = vpop.f32.mrb[0].mxu0
    %v2416 = vadd.f32 %v2243, %v2415
    %v2417 = vpop.f32.mrb[0].mxu0
    %v2418 = vadd.f32 %v2245, %v2417
    %v2419 = vpop.f32.mrb[0].mxu0
    %v2420 = vadd.f32 %v2247, %v2419
    %v2421 = vpop.f32.mrb[0].mxu0
    %v2422 = vadd.f32 %v2249, %v2421
    %2423 = vmatprep.mubr.bf16.mxu0 0
    %2424 = vmatmul.mubr.bf16.gmra.mrb[0].mxu0 %v1447
    %v2425 = vpop.f32.mrb[0].mxu0
    %v2426 = vadd.f32 %v2253, %v2425
    %v2427 = vpop.f32.mrb[0].mxu0
    %v2428 = vadd.f32 %v2255, %v2427
    %v2429 = vpop.f32.mrb[0].mxu0
    %v2430 = vadd.f32 %v2257, %v2429
    %v2431 = vpop.f32.mrb[0].mxu0
    %v2432 = vadd.f32 %v2259, %v2431
    %2433 = vmatprep.mubr.bf16.mxu0 0
    %2434 = vmatmul.mubr.bf16.gmra.mrb[0].mxu0 %v1452
    %v2435 = vpop.f32.mrb[0].mxu0
    %v2436 = vadd.f32 %v2263, %v2435
    %v2437 = vpop.f32.mrb[0].mxu0
    %v2438 = vadd.f32 %v2265, %v2437
    %v2439 = vpop.f32.mrb[0].mxu0
    %v2440 = vadd.f32 %v2267, %v2439
    %v2441 = vpop.f32.mrb[0].mxu0
    %v2442 = vadd.f32 %v2269, %v2441
    %2443 = vmatprep.mubr.bf16.mxu0 0
    %2444 = vmatmul.mubr.bf16.gmra.mrb[0].mxu0 %v1457
    %v2445 = vpop.f32.mrb[0].mxu0
    %v2446 = vadd.f32 %v2273, %v2445
    %v2447 = vpop.f32.mrb[0].mxu0
    %v2448 = vadd.f32 %v2275, %v2447
    %v2449 = vpop.f32.mrb[0].mxu0
    %v2450 = vadd.f32 %v2277, %v2449
    %v2451 = vpop.f32.mrb[0].mxu0
    %v2452 = vadd.f32 %v2279, %v2451
    %2453 = vmatprep.mubr.bf16.mxu0 0
    %2454 = vmatmul.mubr.bf16.gmra.mrb[0].mxu0 %v1462
    %v2455 = vpop.f32.mrb[0].mxu0
    %v2456 = vadd.f32 %v2283, %v2455
    %v2457 = vpop.f32.mrb[0].mxu0
    %v2458 = vadd.f32 %v2285, %v2457
    %v2459 = vpop.f32.mrb[0].mxu0
    %v2460 = vadd.f32 %v2287, %v2459
    %v2461 = vpop.f32.mrb[0].mxu0
    %v2462 = vadd.f32 %v2289, %v2461
    %2463 = vmatprep.mubr.bf16.mxu0 0
    %2464 = vmatmul.mubr.bf16.gmra.mrb[0].mxu0 %v1467
    %v2465 = vpop.f32.mrb[0].mxu0
    %v2466 = vadd.f32 %v2293, %v2465
    %v2467 = vpop.f32.mrb[0].mxu0
    %v2468 = vadd.f32 %v2295, %v2467
    %v2469 = vpop.f32.mrb[0].mxu0
    %v2470 = vadd.f32 %v2297, %v2469
    %v2471 = vpop.f32.mrb[0].mxu0
    %v2472 = vadd.f32 %v2299, %v2471
    %2473 = vmatprep.mubr.bf16.mxu0 0
    %2474 = vmatmul.mubr.bf16.gmra.mrb[0].mxu0 %v1472
    %v2475 = vpop.f32.mrb[0].mxu0
    %v2476 = vadd.f32 %v2303, %v2475
    %v2477 = vpop.f32.mrb[0].mxu0
    %v2478 = vadd.f32 %v2305, %v2477
    %v2479 = vpop.f32.mrb[0].mxu0
    %v2480 = vadd.f32 %v2307, %v2479
    %v2481 = vpop.f32.mrb[0].mxu0
    %v2482 = vadd.f32 %v2309, %v2481
    %2483 = vdwg.mxu0
    %v2484 = vmax.f32 %v2346, %v2348
    %v2485 = vmax.f32 %v2350, %v2352
    %v2486 = vmax.f32 %v2356, %v2358
    %v2487 = vmax.f32 %v2360, %v2362
    %v2488 = vmax.f32 %v2366, %v2368
    %v2489 = vmax.f32 %v2370, %v2372
    %v2490 = vmax.f32 %v2376, %v2378
    %v2491 = vmax.f32 %v2380, %v2382
    %v2492 = vmax.f32 %v2386, %v2388
    %v2493 = vmax.f32 %v2390, %v2392
    %v2494 = vmax.f32 %v2396, %v2398
    %v2495 = vmax.f32 %v2400, %v2402
    %v2496 = vmax.f32 %v2406, %v2408
    %v2497 = vmax.f32 %v2410, %v2412
    %v2498 = vmax.f32 %v2416, %v2418
    %v2499 = vmax.f32 %v2420, %v2422
    %v2500 = vmax.f32 %v2426, %v2428
    %v2501 = vmax.f32 %v2430, %v2432
    %v2502 = vmax.f32 %v2436, %v2438
    %v2503 = vmax.f32 %v2440, %v2442
    %v2504 = vmax.f32 %v2446, %v2448
    %v2505 = vmax.f32 %v2450, %v2452
    %v2506 = vmax.f32 %v2456, %v2458
    %v2507 = vmax.f32 %v2460, %v2462
    %v2508 = vmax.f32 %v2466, %v2468
    %v2509 = vmax.f32 %v2470, %v2472
    %v2510 = vmax.f32 %v2476, %v2478
    %v2511 = vmax.f32 %v2480, %v2482
    %2512 = vst [vmem:[#allocation2] sm:$0xff] %v2484
    %2513 = vst [vmem:[#allocation2 + $0x8] sm:$0xff] %v2485
    %2514 = vst [vmem:[#allocation2 + $0x10] sm:$0xff] %v2486
    %2515 = vst [vmem:[#allocation2 + $0x18] sm:$0xff] %v2487
    %2516 = vst [vmem:[#allocation2 + $0x20] sm:$0xff] %v2488
    %2517 = vst [vmem:[#allocation2 + $0x28] sm:$0xff] %v2489
    %2518 = vst [vmem:[#allocation2 + $0x30] sm:$0xff] %v2490
    %2519 = vst [vmem:[#allocation2 + $0x38] sm:$0xff] %v2491
    %2520 = vst [vmem:[#allocation2 + $0x40] sm:$0xff] %v2492
    %2521 = vst [vmem:[#allocation2 + $0x48] sm:$0xff] %v2493
    %2522 = vst [vmem:[#allocation2 + $0x50] sm:$0xff] %v2494
    %2523 = vst [vmem:[#allocation2 + $0x58] sm:$0xff] %v2495
    %2524 = vst [vmem:[#allocation2 + $0x60] sm:$0xff] %v2496
    %2525 = vst [vmem:[#allocation2 + $0x68] sm:$0xff] %v2497
    %2526 = vst [vmem:[#allocation2 + $0x70] sm:$0xff] %v2498
    %2527 = vst [vmem:[#allocation2 + $0x78] sm:$0xff] %v2499
    %2528 = vst [vmem:[#allocation2 + $0x80] sm:$0xff] %v2500
    %2529 = vst [vmem:[#allocation2 + $0x88] sm:$0xff] %v2501
    %2530 = vst [vmem:[#allocation2 + $0x90] sm:$0xff] %v2502
    %2531 = vst [vmem:[#allocation2 + $0x98] sm:$0xff] %v2503
    %2532 = vst [vmem:[#allocation2 + $0xa0] sm:$0xff] %v2504
    %2533 = vst [vmem:[#allocation2 + $0xa8] sm:$0xff] %v2505
    %2534 = vst [vmem:[#allocation2 + $0xb0] sm:$0xff] %v2506
    %2535 = vst [vmem:[#allocation2 + $0xb8] sm:$0xff] %v2507
    %2536 = vst [vmem:[#allocation2 + $0xc0] sm:$0xff] %v2508
    %2537 = vst [vmem:[#allocation2 + $0xc8] sm:$0xff] %v2509
    %2538 = vst [vmem:[#allocation2 + $0xd0] sm:$0xff] %v2510
    %2539 = vst [vmem:[#allocation2 + $0xd8] sm:$0xff] %v2511
    %v2540 = vld [vmem:[#allocation2] ss:$14 sm:$0xff]
    %s2541 = scalar_lea.vmem [#allocation2], 112
    %v2542 = vld [vmem:[%s2541] ss:$14 sm:$0xff]
    %s2543 = scalar_lea.vmem [#allocation2], 1
    %v2544 = vld [vmem:[%s2543] ss:$14 sm:$0xff]
    %s2545 = scalar_lea.vmem [#allocation2], 113
    %v2546 = vld [vmem:[%s2545] ss:$14 sm:$0xff]
    %v2547 = vmax.f32 %v2540, %v2544
    %v2548 = vmax.f32 %v2542, %v2546
    %v2549 = vmax.f32 %v2547, 0.0
    %v2550 = vmax.f32 %v2548, 0.0
    %s2551 = scalar_lea.vmem [#allocation2], 2
    %v2552 = vld [vmem:[%s2551] ss:$14 sm:$0xff]
    %s2553 = scalar_lea.vmem [#allocation2], 114
    %v2554 = vld [vmem:[%s2553] ss:$14 sm:$0xff]
    %s2555 = scalar_lea.vmem [#allocation2], 3
    %v2556 = vld [vmem:[%s2555] ss:$14 sm:$0xff]
    %s2557 = scalar_lea.vmem [#allocation2], 115
    %v2558 = vld [vmem:[%s2557] ss:$14 sm:$0xff]
    %v2559 = vmax.f32 %v2552, %v2556
    %v2560 = vmax.f32 %v2554, %v2558
    %v2561 = vmax.f32 %v2559, 0.0
    %v2562 = vmax.f32 %v2560, 0.0
    %s2563 = scalar_lea.vmem [#allocation2], 4
    %v2564 = vld [vmem:[%s2563] ss:$14 sm:$0xff]
    %s2565 = scalar_lea.vmem [#allocation2], 116
    %v2566 = vld [vmem:[%s2565] ss:$14 sm:$0xff]
    %s2567 = scalar_lea.vmem [#allocation2], 5
    %v2568 = vld [vmem:[%s2567] ss:$14 sm:$0xff]
    %s2569 = scalar_lea.vmem [#allocation2], 117
    %v2570 = vld [vmem:[%s2569] ss:$14 sm:$0xff]
    %v2571 = vmax.f32 %v2564, %v2568
    %v2572 = vmax.f32 %v2566, %v2570
    %v2573 = vmax.f32 %v2571, 0.0
    %v2574 = vmax.f32 %v2572, 0.0
    %s2575 = scalar_lea.vmem [#allocation2], 6
    %v2576 = vld [vmem:[%s2575] ss:$14 sm:$0xff]
    %s2577 = scalar_lea.vmem [#allocation2], 118
    %v2578 = vld [vmem:[%s2577] ss:$14 sm:$0xff]
    %s2579 = scalar_lea.vmem [#allocation2], 7
    %v2580 = vld [vmem:[%s2579] ss:$14 sm:$0xff]
    %s2581 = scalar_lea.vmem [#allocation2], 119
    %v2582 = vld [vmem:[%s2581] ss:$14 sm:$0xff]
    %v2583 = vmax.f32 %v2576, %v2580
    %v2584 = vmax.f32 %v2578, %v2582
    %v2585 = vmax.f32 %v2583, 0.0
    %v2586 = vmax.f32 %v2584, 0.0
    %v2587 = vld [vmem:[%s5] sm:$0xff]
    %v2588 = vld [vmem:[%s5 + $0x8] sm:$0xff]
    %v2589 = vld [vmem:[%s5 + $0x10] sm:$0xff]
    %v2590 = vld [vmem:[%s5 + $0x18] sm:$0xff]
    %v2591 = vld [vmem:[%s5 + $0x20] sm:$0xff]
    %v2592 = vld [vmem:[%s5 + $0x28] sm:$0xff]
    %v2593 = vld [vmem:[%s5 + $0x30] sm:$0xff]
    %v2594 = vld [vmem:[%s5 + $0x38] sm:$0xff]
    %v2595 = vld [vmem:[%s5 + $0x40] sm:$0xff]
    %v2596 = vld [vmem:[%s5 + $0x48] sm:$0xff]
    %v2597 = vld [vmem:[%s5 + $0x50] sm:$0xff]
    %v2598 = vld [vmem:[%s5 + $0x58] sm:$0xff]
    %v2599 = vld [vmem:[%s5 + $0x60] sm:$0xff]
    %v2600 = vld [vmem:[%s5 + $0x68] sm:$0xff]
    %v2601 = vld [vmem:[%s5 + $0x70] sm:$0xff]
    %v2602 = vld [vmem:[%s5 + $0x78] sm:$0xff]
    %v2603 = vld [vmem:[%s5 + $0x80] sm:$0xff]
    %v2604 = vld [vmem:[%s5 + $0x88] sm:$0xff]
    %v2605 = vld [vmem:[%s5 + $0x90] sm:$0xff]
    %v2606 = vld [vmem:[%s5 + $0x98] sm:$0xff]
    %v2607 = vld [vmem:[%s5 + $0xa0] sm:$0xff]
    %v2608 = vld [vmem:[%s5 + $0xa8] sm:$0xff]
    %v2609 = vld [vmem:[%s5 + $0xb0] sm:$0xff]
    %v2610 = vld [vmem:[%s5 + $0xb8] sm:$0xff]
    %v2611 = vld [vmem:[%s5 + $0xc0] sm:$0xff]
    %v2612 = vld [vmem:[%s5 + $0xc8] sm:$0xff]
    %v2613 = vld [vmem:[%s5 + $0xd0] sm:$0xff]
    %v2614 = vld [vmem:[%s5 + $0xd8] sm:$0xff]
    %v2615 = vld [vmem:[%s5 + $0xe0] sm:$0xff]
    %v2616 = vld [vmem:[%s5 + $0xe8] sm:$0xff]
    %v2617 = vld [vmem:[%s5 + $0xf0] sm:$0xff]
    %v2618 = vld [vmem:[%s5 + $0xf8] sm:$0xff]
    %v2619 = vld [vmem:[%s5 + $0x100] sm:$0xff]
    %v2620 = vld [vmem:[%s5 + $0x108] sm:$0xff]
    %v2621 = vld [vmem:[%s5 + $0x110] sm:$0xff]
    %v2622 = vld [vmem:[%s5 + $0x118] sm:$0xff]
    %v2623 = vld [vmem:[%s5 + $0x120] sm:$0xff]
    %v2624 = vld [vmem:[%s5 + $0x128] sm:$0xff]
    %v2625 = vld [vmem:[%s5 + $0x130] sm:$0xff]
    %v2626 = vld [vmem:[%s5 + $0x138] sm:$0xff]
    %v2627 = vld [vmem:[%s5 + $0x140] sm:$0xff]
    %v2628 = vld [vmem:[%s5 + $0x148] sm:$0xff]
    %v2629 = vld [vmem:[%s5 + $0x150] sm:$0xff]
    %v2630 = vld [vmem:[%s5 + $0x158] sm:$0xff]
    %v2631 = vld [vmem:[%s5 + $0x160] sm:$0xff]
    %v2632 = vld [vmem:[%s5 + $0x168] sm:$0xff]
    %v2633 = vld [vmem:[%s5 + $0x170] sm:$0xff]
    %v2634 = vld [vmem:[%s5 + $0x178] sm:$0xff]
    %v2635 = vld [vmem:[%s5 + $0x180] sm:$0xff]
    %v2636 = vld [vmem:[%s5 + $0x188] sm:$0xff]
    %v2637 = vld [vmem:[%s5 + $0x190] sm:$0xff]
    %v2638 = vld [vmem:[%s5 + $0x198] sm:$0xff]
    %v2639 = vld [vmem:[%s5 + $0x1a0] sm:$0xff]
    %v2640 = vld [vmem:[%s5 + $0x1a8] sm:$0xff]
    %v2641 = vld [vmem:[%s5 + $0x1b0] sm:$0xff]
    %v2642 = vld [vmem:[%s5 + $0x1b8] sm:$0xff]
    %v2643 = vld [vmem:[%s5 + $0x1c0] sm:$0xff]
    %v2644 = vld [vmem:[%s5 + $0x1c8] sm:$0xff]
    %v2645 = vld [vmem:[%s5 + $0x1d0] sm:$0xff]
    %v2646 = vld [vmem:[%s5 + $0x1d8] sm:$0xff]
    %v2647 = vld [vmem:[%s5 + $0x1e0] sm:$0xff]
    %v2648 = vld [vmem:[%s5 + $0x1e8] sm:$0xff]
    %v2649 = vld [vmem:[%s5 + $0x1f0] sm:$0xff]
    %v2650 = vld [vmem:[%s5 + $0x1f8] sm:$0xff]
    %v2651 = vld [vmem:[%s6] sm:$0x1]
    %v2653 = vlaneseq
    %v2654 = vshrl.u32 %v2653, 7
    %v2655 = vsub.s32 0, %v2654
    %v2656 = vrot.slane %v2651, %v2655
    %2658 = vmatprep.subr.mxu0 0.0
    %2659 = vmatpush1.msra.mxu0 %v2587
    %2660 = vmatprep.subr.mxu0 0.0
    %2661 = vmatpush1.msra.mxu0 %v2588
    %2662 = vmatprep.subr.mxu0 0.0
    %2663 = vmatpush1.msra.mxu0 %v2589
    %2664 = vmatprep.subr.mxu0 0.0
    %2665 = vmatpush1.msra.mxu0 %v2590
    %2666 = vmatprep.subr.mxu0 0.0
    %2667 = vmatpush1.msra.mxu0 %v2591
    %2668 = vmatprep.subr.mxu0 0.0
    %2669 = vmatpush1.msra.mxu0 %v2592
    %2670 = vmatprep.subr.mxu0 0.0
    %2671 = vmatpush1.msra.mxu0 %v2593
    %2672 = vmatprep.subr.mxu0 0.0
    %2673 = vmatpush1.msra.mxu0 %v2594
    %2674 = vmatprep.subr.mxu0 0.0
    %2675 = vmatpush1.msra.mxu0 %v2595
    %2676 = vmatprep.subr.mxu0 0.0
    %2677 = vmatpush1.msra.mxu0 %v2596
    %2678 = vmatprep.subr.mxu0 0.0
    %2679 = vmatpush1.msra.mxu0 %v2597
    %2680 = vmatprep.subr.mxu0 0.0
    %2681 = vmatpush1.msra.mxu0 %v2598
    %2682 = vmatprep.subr.mxu0 0.0
    %2683 = vmatpush1.msra.mxu0 %v2599
    %2684 = vmatprep.subr.mxu0 0.0
    %2685 = vmatpush1.msra.mxu0 %v2600
    %2686 = vmatprep.subr.mxu0 0.0
    %2687 = vmatpush1.msra.mxu0 %v2601
    %2688 = vmatprep.subr.mxu0 0.0
    %2689 = vmatpush1.msra.mxu0 %v2602
    %2690 = vmatprep.subr.mxu0 0.0
    %2691 = vmatpush1.msra.mxu0 %v2603
    %2692 = vmatprep.subr.mxu0 0.0
    %2693 = vmatpush1.msra.mxu0 %v2604
    %2694 = vmatprep.subr.mxu0 0.0
    %2695 = vmatpush1.msra.mxu0 %v2605
    %2696 = vmatprep.subr.mxu0 0.0
    %2697 = vmatpush1.msra.mxu0 %v2606
    %2698 = vmatprep.subr.mxu0 0.0
    %2699 = vmatpush1.msra.mxu0 %v2607
    %2700 = vmatprep.subr.mxu0 0.0
    %2701 = vmatpush1.msra.mxu0 %v2608
    %2702 = vmatprep.subr.mxu0 0.0
    %2703 = vmatpush1.msra.mxu0 %v2609
    %2704 = vmatprep.subr.mxu0 0.0
    %2705 = vmatpush1.msra.mxu0 %v2610
    %2706 = vmatprep.subr.mxu0 0.0
    %2707 = vmatpush1.msra.mxu0 %v2611
    %2708 = vmatprep.subr.mxu0 0.0
    %2709 = vmatpush1.msra.mxu0 %v2612
    %2710 = vmatprep.subr.mxu0 0.0
    %2711 = vmatpush1.msra.mxu0 %v2613
    %2712 = vmatprep.subr.mxu0 0.0
    %2713 = vmatpush1.msra.mxu0 %v2614
    %2714 = vmatprep.subr.mxu0 0.0
    %2715 = vmatpush1.msra.mxu0 %v2615
    %2716 = vmatprep.subr.mxu0 0.0
    %2717 = vmatpush1.msra.mxu0 %v2616
    %2718 = vmatprep.subr.mxu0 0.0
    %2719 = vmatpush1.msra.mxu0 %v2617
    %2720 = vmatprep.subr.mxu0 0.0
    %2721 = vmatpush1.msra.mxu0 %v2618
    %2722 = vmatprep.mubr.f32.mxu0 %v2561
    %2723 = vmatmul.mubr.f32.gmra.mrb[0].mxu0 %v2549
    %v2724 = vpop.f32.mrb[0].mxu0
    %v2725 = vadd.f32 %v2656, %v2724
    %v2726 = vpop.f32.mrb[0].mxu0
    %2727 = vmatprep.mubr.f32.mxu0 %v2562
    %2728 = vmatmul.mubr.f32.gmra.mrb[0].mxu0 %v2550
    %v2729 = vpop.f32.mrb[0].mxu0
    %v2730 = vadd.f32 %v2656, %v2729
    %v2731 = vpop.f32.mrb[0].mxu0
    %2732 = vdwg.mxu0
    %2733 = vmatprep.subr.mxu0 0.0
    %2734 = vmatpush1.msra.mxu0 %v2619
    %2735 = vmatprep.subr.mxu0 0.0
    %2736 = vmatpush1.msra.mxu0 %v2620
    %2737 = vmatprep.subr.mxu0 0.0
    %2738 = vmatpush1.msra.mxu0 %v2621
    %2739 = vmatprep.subr.mxu0 0.0
    %2740 = vmatpush1.msra.mxu0 %v2622
    %2741 = vmatprep.subr.mxu0 0.0
    %2742 = vmatpush1.msra.mxu0 %v2623
    %2743 = vmatprep.subr.mxu0 0.0
    %2744 = vmatpush1.msra.mxu0 %v2624
    %2745 = vmatprep.subr.mxu0 0.0
    %2746 = vmatpush1.msra.mxu0 %v2625
    %2747 = vmatprep.subr.mxu0 0.0
    %2748 = vmatpush1.msra.mxu0 %v2626
    %2749 = vmatprep.subr.mxu0 0.0
    %2750 = vmatpush1.msra.mxu0 %v2627
    %2751 = vmatprep.subr.mxu0 0.0
    %2752 = vmatpush1.msra.mxu0 %v2628
    %2753 = vmatprep.subr.mxu0 0.0
    %2754 = vmatpush1.msra.mxu0 %v2629
    %2755 = vmatprep.subr.mxu0 0.0
    %2756 = vmatpush1.msra.mxu0 %v2630
    %2757 = vmatprep.subr.mxu0 0.0
    %2758 = vmatpush1.msra.mxu0 %v2631
    %2759 = vmatprep.subr.mxu0 0.0
    %2760 = vmatpush1.msra.mxu0 %v2632
    %2761 = vmatprep.subr.mxu0 0.0
    %2762 = vmatpush1.msra.mxu0 %v2633
    %2763 = vmatprep.subr.mxu0 0.0
    %2764 = vmatpush1.msra.mxu0 %v2634
    %2765 = vmatprep.subr.mxu0 0.0
    %2766 = vmatpush1.msra.mxu0 %v2635
    %2767 = vmatprep.subr.mxu0 0.0
    %2768 = vmatpush1.msra.mxu0 %v2636
    %2769 = vmatprep.subr.mxu0 0.0
    %2770 = vmatpush1.msra.mxu0 %v2637
    %2771 = vmatprep.subr.mxu0 0.0
    %2772 = vmatpush1.msra.mxu0 %v2638
    %2773 = vmatprep.subr.mxu0 0.0
    %2774 = vmatpush1.msra.mxu0 %v2639
    %2775 = vmatprep.subr.mxu0 0.0
    %2776 = vmatpush1.msra.mxu0 %v2640
    %2777 = vmatprep.subr.mxu0 0.0
    %2778 = vmatpush1.msra.mxu0 %v2641
    %2779 = vmatprep.subr.mxu0 0.0
    %2780 = vmatpush1.msra.mxu0 %v2642
    %2781 = vmatprep.subr.mxu0 0.0
    %2782 = vmatpush1.msra.mxu0 %v2643
    %2783 = vmatprep.subr.mxu0 0.0
    %2784 = vmatpush1.msra.mxu0 %v2644
    %2785 = vmatprep.subr.mxu0 0.0
    %2786 = vmatpush1.msra.mxu0 %v2645
    %2787 = vmatprep.subr.mxu0 0.0
    %2788 = vmatpush1.msra.mxu0 %v2646
    %2789 = vmatprep.subr.mxu0 0.0
    %2790 = vmatpush1.msra.mxu0 %v2647
    %2791 = vmatprep.subr.mxu0 0.0
    %2792 = vmatpush1.msra.mxu0 %v2648
    %2793 = vmatprep.subr.mxu0 0.0
    %2794 = vmatpush1.msra.mxu0 %v2649
    %2795 = vmatprep.subr.mxu0 0.0
    %2796 = vmatpush1.msra.mxu0 %v2650
    %2797 = vmatprep.mubr.f32.mxu0 %v2585
    %2798 = vmatmul.mubr.f32.gmra.mrb[0].mxu0 %v2573
    %v2799 = vpop.f32.mrb[0].mxu0
    %v2800 = vadd.f32 %v2725, %v2799
    %v2801 = vpop.f32.mrb[0].mxu0
    %2802 = vmatprep.mubr.f32.mxu0 %v2586
    %2803 = vmatmul.mubr.f32.gmra.mrb[0].mxu0 %v2574
    %v2804 = vpop.f32.mrb[0].mxu0
    %v2805 = vadd.f32 %v2730, %v2804
    %v2806 = vpop.f32.mrb[0].mxu0
    %2807 = vdwg.mxu0
    %v2808 = vmax.f32 %v2800, 0.0
    %v2809 = vmax.f32 %v2805, 0.0
    %v2810 = vld [vmem:[%s7] sm:$0xff]
    %v2811 = vld [vmem:[%s7 + $0x8] sm:$0xff]
    %v2812 = vld [vmem:[%s7 + $0x10] sm:$0xff]
    %v2813 = vld [vmem:[%s7 + $0x18] sm:$0xff]
    %v2814 = vld [vmem:[%s7 + $0x20] sm:$0xff]
    %v2815 = vld [vmem:[%s7 + $0x28] sm:$0xff]
    %v2816 = vld [vmem:[%s7 + $0x30] sm:$0x3]
    %v2817 = vld [vmem:[%s8] sm:$0x1]
    %v2819 = vlaneseq
    %v2820 = vshrl.u32 %v2819, 7
    %v2821 = vsub.s32 0, %v2820
    %v2822 = vrot.slane %v2817, %v2821
    %vm2824 = vcmask 408576
    %v2826 = vsel %vm2824, %v2808, 0
    %v2829 = vsel %vm2824, %v2809, 0
    %vm2831 = vcmask 1041408
    %v2833 = vsel %vm2831, %v2816, 0
    %2835 = vmatprep.subr.mxu0 0.0
    %2836 = vmatpush1.msra.mxu0 %v2810
    %2837 = vmatprep.subr.mxu0 0.0
    %2838 = vmatpush1.msra.mxu0 %v2811
    %2839 = vmatprep.subr.mxu0 0.0
    %2840 = vmatpush1.msra.mxu0 %v2812
    %2841 = vmatprep.subr.mxu0 0.0
    %2842 = vmatpush1.msra.mxu0 %v2813
    %2843 = vmatprep.subr.mxu0 0.0
    %2844 = vmatpush1.msra.mxu0 %v2814
    %2845 = vmatprep.subr.mxu0 0.0
    %2846 = vmatpush1.msra.mxu0 %v2815
    %2847 = vmatprep.subr.mxu0 0.0
    %2848 = vmatpush1.msra.mxu0 %v2833
    %2849 = vmatprep.subr.mxu0 0.0
    %2850 = vmatpush1.msra.mxu0 0.0
    %2851 = vmatprep.subr.mxu0 0.0
    %2852 = vmatpush1.msra.mxu0 0.0
    %2853 = vmatprep.subr.mxu0 0.0
    %2854 = vmatpush1.msra.mxu0 0.0
    %2855 = vmatprep.subr.mxu0 0.0
    %2856 = vmatpush1.msra.mxu0 0.0
    %2857 = vmatprep.subr.mxu0 0.0
    %2858 = vmatpush1.msra.mxu0 0.0
    %2859 = vmatprep.subr.mxu0 0.0
    %2860 = vmatpush1.msra.mxu0 0.0
    %2861 = vmatprep.subr.mxu0 0.0
    %2862 = vmatpush1.msra.mxu0 0.0
    %2863 = vmatprep.subr.mxu0 0.0
    %2864 = vmatpush1.msra.mxu0 0.0
    %2865 = vmatprep.subr.mxu0 0.0
    %2866 = vmatpush1.msra.mxu0 0.0
    %2867 = vmatprep.subr.mxu0 0.0
    %2868 = vmatpush1.msra.mxu0 0.0
    %2869 = vmatprep.subr.mxu0 0.0
    %2870 = vmatpush1.msra.mxu0 0.0
    %2871 = vmatprep.subr.mxu0 0.0
    %2872 = vmatpush1.msra.mxu0 0.0
    %2873 = vmatprep.subr.mxu0 0.0
    %2874 = vmatpush1.msra.mxu0 0.0
    %2875 = vmatprep.subr.mxu0 0.0
    %2876 = vmatpush1.msra.mxu0 0.0
    %2877 = vmatprep.subr.mxu0 0.0
    %2878 = vmatpush1.msra.mxu0 0.0
    %2879 = vmatprep.subr.mxu0 0.0
    %2880 = vmatpush1.msra.mxu0 0.0
    %2881 = vmatprep.subr.mxu0 0.0
    %2882 = vmatpush1.msra.mxu0 0.0
    %2883 = vmatprep.subr.mxu0 0.0
    %2884 = vmatpush1.msra.mxu0 0.0
    %2885 = vmatprep.subr.mxu0 0.0
    %2886 = vmatpush1.msra.mxu0 0.0
    %2887 = vmatprep.subr.mxu0 0.0
    %2888 = vmatpush1.msra.mxu0 0.0
    %2889 = vmatprep.subr.mxu0 0.0
    %2890 = vmatpush1.msra.mxu0 0.0
    %2891 = vmatprep.subr.mxu0 0.0
    %2892 = vmatpush1.msra.mxu0 0.0
    %2893 = vmatprep.subr.mxu0 0.0
    %2894 = vmatpush1.msra.mxu0 0.0
    %2895 = vmatprep.subr.mxu0 0.0
    %2896 = vmatpush1.msra.mxu0 0.0
    %2897 = vmatprep.subr.mxu0 0.0
    %2898 = vmatpush1.msra.mxu0 0.0
    %2899 = vmatprep.mubr.f32.mxu0 0.0
    %2900 = vmatmul.mubr.f32.gmra.mrb[0].mxu0 %v2826
    %v2901 = vpop.f32.mrb[0].mxu0
    %v2902 = vadd.f32 %v2822, %v2901
    %v2903 = vpop.f32.mrb[0].mxu0
    %2904 = vmatprep.mubr.f32.mxu0 0.0
    %2905 = vmatmul.mubr.f32.gmra.mrb[0].mxu0 %v2829
    %v2906 = vpop.f32.mrb[0].mxu0
    %v2907 = vadd.f32 %v2822, %v2906
    %v2908 = vpop.f32.mrb[0].mxu0
    %2909 = vdwg.mxu0
    %v2910 = vld [vmem:[#allocation3] sm:$0xff]
    %v2911 = vld [vmem:[#allocation3 + $0x8] sm:$0xff]
    %v2912 = vld [vmem:[#allocation3 + $0x10] sm:$0xff]
    %v2913 = vld [vmem:[#allocation3 + $0x18] sm:$0xff]
    %v2914 = vld [vmem:[#allocation3 + $0x20] sm:$0xff]
    %v2915 = vld [vmem:[#allocation3 + $0x28] sm:$0xff]
    %v2916 = vld [vmem:[#allocation3 + $0x30] sm:$0x3]
    %v2917 = vld [vmem:[%s10] sm:$0x1]
    %v2919 = vlaneseq
    %v2920 = vshrl.u32 %v2919, 7
    %v2921 = vsub.s32 0, %v2920
    %v2922 = vrot.slane %v2917, %v2921
    %v2925 = vsel %vm2824, %v2902, 0
    %v2928 = vsel %vm2824, %v2907, 0
    %v2931 = vsel %vm2831, %v2916, 0
    %2933 = vmatprep.subr.mxu0 0.0
    %2934 = vmatpush1.msra.mxu0 %v2910
    %2935 = vmatprep.subr.mxu0 0.0
    %2936 = vmatpush1.msra.mxu0 %v2911
    %2937 = vmatprep.subr.mxu0 0.0
    %2938 = vmatpush1.msra.mxu0 %v2912
    %2939 = vmatprep.subr.mxu0 0.0
    %2940 = vmatpush1.msra.mxu0 %v2913
    %2941 = vmatprep.subr.mxu0 0.0
    %2942 = vmatpush1.msra.mxu0 %v2914
    %2943 = vmatprep.subr.mxu0 0.0
    %2944 = vmatpush1.msra.mxu0 %v2915
    %2945 = vmatprep.subr.mxu0 0.0
    %2946 = vmatpush1.msra.mxu0 %v2931
    %2947 = vmatprep.subr.mxu0 0.0
    %2948 = vmatpush1.msra.mxu0 0.0
    %2949 = vmatprep.subr.mxu0 0.0
    %2950 = vmatpush1.msra.mxu0 0.0
    %2951 = vmatprep.subr.mxu0 0.0
    %2952 = vmatpush1.msra.mxu0 0.0
    %2953 = vmatprep.subr.mxu0 0.0
    %2954 = vmatpush1.msra.mxu0 0.0
    %2955 = vmatprep.subr.mxu0 0.0
    %2956 = vmatpush1.msra.mxu0 0.0
    %2957 = vmatprep.subr.mxu0 0.0
    %2958 = vmatpush1.msra.mxu0 0.0
    %2959 = vmatprep.subr.mxu0 0.0
    %2960 = vmatpush1.msra.mxu0 0.0
    %2961 = vmatprep.subr.mxu0 0.0
    %2962 = vmatpush1.msra.mxu0 0.0
    %2963 = vmatprep.subr.mxu0 0.0
    %2964 = vmatpush1.msra.mxu0 0.0
    %2965 = vmatprep.subr.mxu0 0.0
    %2966 = vmatpush1.msra.mxu0 0.0
    %2967 = vmatprep.subr.mxu0 0.0
    %2968 = vmatpush1.msra.mxu0 0.0
    %2969 = vmatprep.subr.mxu0 0.0
    %2970 = vmatpush1.msra.mxu0 0.0
    %2971 = vmatprep.subr.mxu0 0.0
    %2972 = vmatpush1.msra.mxu0 0.0
    %2973 = vmatprep.subr.mxu0 0.0
    %2974 = vmatpush1.msra.mxu0 0.0
    %2975 = vmatprep.subr.mxu0 0.0
    %2976 = vmatpush1.msra.mxu0 0.0
    %2977 = vmatprep.subr.mxu0 0.0
    %2978 = vmatpush1.msra.mxu0 0.0
    %2979 = vmatprep.subr.mxu0 0.0
    %2980 = vmatpush1.msra.mxu0 0.0
    %2981 = vmatprep.subr.mxu0 0.0
    %2982 = vmatpush1.msra.mxu0 0.0
    %2983 = vmatprep.subr.mxu0 0.0
    %2984 = vmatpush1.msra.mxu0 0.0
    %2985 = vmatprep.subr.mxu0 0.0
    %2986 = vmatpush1.msra.mxu0 0.0
    %2987 = vmatprep.subr.mxu0 0.0
    %2988 = vmatpush1.msra.mxu0 0.0
    %2989 = vmatprep.subr.mxu0 0.0
    %2990 = vmatpush1.msra.mxu0 0.0
    %2991 = vmatprep.subr.mxu0 0.0
    %2992 = vmatpush1.msra.mxu0 0.0
    %2993 = vmatprep.subr.mxu0 0.0
    %2994 = vmatpush1.msra.mxu0 0.0
    %2995 = vmatprep.subr.mxu0 0.0
    %2996 = vmatpush1.msra.mxu0 0.0
    %2997 = vmatprep.mubr.f32.mxu0 0.0
    %2998 = vmatmul.mubr.f32.gmra.mrb[0].mxu0 %v2925
    %v2999 = vpop.f32.mrb[0].mxu0
    %v3000 = vadd.f32 %v2922, %v2999
    %v3001 = vpop.f32.mrb[0].mxu0
    %3002 = vmatprep.mubr.f32.mxu0 0.0
    %3003 = vmatmul.mubr.f32.gmra.mrb[0].mxu0 %v2928
    %v3004 = vpop.f32.mrb[0].mxu0
    %v3005 = vadd.f32 %v2922, %v3004
    %v3006 = vpop.f32.mrb[0].mxu0
    %3007 = vdwg.mxu0
    %3008 = vst [vmem:[#allocation6] sm:$0xff] %v3000
    %3009 = vst [vmem:[#allocation6 + $0x8] sm:$0xff] %v3005
    // Predicated region
    $region50: #{tpu_custom_call.1} parent=1 // pred_check
      _
    $region51: #{tpu_custom_call.1} parent=1 // pred_check_branch
      %3011 = sbr.rel (0) target = $region53
    $region52: #{tpu_custom_call.1} parent=1 // pred_region
      %s3013 = ssub.s32 256, 256
      %3014 = vsyncadd [#allocation5], %s3013
      %s3015 = sshll.u32 [#allocation6], 4
      %s3016 = int_to_ptr.vmem [resolvable:$true] %s3015
      %3021 = dma.vmem_to_hbm [thread:$0]  %s3016, 256, %s11, [#allocation5], 128, 128, 8
    $region53: #{tpu_custom_call.1} parent=1 // pred_fallthru
      _
    // Predicated region
    $region54: #{tpu_custom_call.1} parent=1 // pred_check
      _
    $region55: #{tpu_custom_call.1} parent=1 // pred_check_branch
      %3023 = sbr.rel (0) target = $region57
    $region56: #{tpu_custom_call.1} parent=1 // pred_region
      %3024 = dma.done [#allocation5], 256
    $region57: #{tpu_custom_call.1} parent=1 // pred_fallthru
      _
    %3025 = vsyncpa [#allocation4], 1
    %3026 = vsyncpa [#allocation5], 1

</llo_original>
